<compile_context>
chip_gen: v5e
topology: v5e:2x2
jax: 0.10.0
libtpu: 0.0.40
codegen_flags: <defaults>
</compile_context>

<pallas_src>
import math

import jax
import jax.numpy as jnp
from jax.experimental import pallas as pl
from jax.experimental.pallas import tpu as pltpu


def _gfft_kernel_nophase(x_ref, bt_ref, o_ref):
    """z = (2*pi*B)^T @ x_tile ; out[:M] = sin(z), out[M:] = cos(z)."""
    m = bt_ref.shape[0]
    z = jnp.dot(
        bt_ref[...],
        x_ref[0],
        preferred_element_type=jnp.float32,
        precision=jax.lax.Precision.HIGHEST,
    )
    o_ref[0, :m, :] = jnp.sin(z).astype(o_ref.dtype)
    o_ref[0, m:, :] = jnp.cos(z).astype(o_ref.dtype)


def _gfft_kernel_phase(phase_ref, x_ref, bt_ref, o_ref):
    """z = (2*pi*B)^T @ x_tile + phase ; out[:M] = sin(z), out[M:] = cos(z)."""
    m = bt_ref.shape[0]
    z = jnp.dot(
        bt_ref[...],
        x_ref[0],
        preferred_element_type=jnp.float32,
        precision=jax.lax.Precision.HIGHEST,
    )
    z = z + phase_ref[0]
    o_ref[0, :m, :] = jnp.sin(z).astype(o_ref.dtype)
    o_ref[0, m:, :] = jnp.cos(z).astype(o_ref.dtype)


def _vmem_capacity_bytes():
    """Physical VMEM per TensorCore; conservative 64 MiB (v7x) fallback."""
    try:
        return int(pltpu.get_tpu_info().vmem_capacity_bytes)
    except Exception:
        return 64 * 1024 * 1024


def _choose_tile_wh(wh, mapping_dim, channels, *, max_tile_wh=32768):
    """Lane-aligned W*H tile sized from the VMEM budget (double-buffered)."""
    dtype_bytes = 4  # f32 in and out
    # Bytes per lane-column per buffer: output rows (2M) + input rows (C).
    per_col = dtype_bytes * (2 * mapping_dim + channels)
    # Use ~2/3 of physical VMEM for the double-buffered tiles; leave headroom
    # for the resident projection matrix, semaphores and compiler scratch.
    budget = (_vmem_capacity_bytes() * 2) // 3
    tile = budget // (2 * per_col)          # 2 == double buffering
    tile = min(tile, max_tile_wh)           # diminishing returns past ~32K
    tile = max(128, (tile // 128) * 128)    # lane-aligned
    if wh <= tile:
        return wh                           # single block == full dim (legal)
    return tile


def gaussian_fourier_feature_transform(x, b_mat, phase=None, *, max_tile_wh=32768):
    """x: [B, C, W, H] float32, b_mat: [C, M]. Returns [B, 2M, W, H] float32."""
    batches, channels, width, height = x.shape
    assert channels == b_mat.shape[0], (
        f"Expected input to have {b_mat.shape[0]} channels (got {channels})"
    )
    mapping_dim = b_mat.shape[1]
    wh = width * height
    tile_wh = _choose_tile_wh(wh, mapping_dim, channels, max_tile_wh=max_tile_wh)
    num_j = pl.cdiv(wh, tile_wh)

    # Free reshape (no data movement): [B, C, W, H] -> [B, C, W*H].
    x_flat = x.reshape(batches, channels, wh)

    # Fold 2*pi into the tiny constant projection matrix, transposed to [M, C]
    # so the kernel's matmul output is already channel-major.
    bt_scaled = (2.0 * math.pi) * b_mat.T.astype(jnp.float32)

    # VMEM budget: double-buffered input + output tiles + margin.
    per_step_bytes = 4 * tile_wh * (2 * mapping_dim + channels)
    vmem_limit = min(
        max(2 * per_step_bytes + (8 << 20), 32 << 20),
        (_vmem_capacity_bytes() * 3) // 4,
    )

    compiler_params = pltpu.CompilerParams(
        dimension_semantics=("parallel", "parallel"),
        vmem_limit_bytes=int(vmem_limit),
    )

    # Grid leads with the long W*H-tile axis so a 2-TC (v7x) split stays
    # balanced even when batches == 1.
    grid = (num_j, batches)
    x_spec = pl.BlockSpec((1, channels, tile_wh), lambda j, b: (b, 0, j))
    bt_spec = pl.BlockSpec((mapping_dim, channels), lambda j, b: (0, 0))
    out_spec = pl.BlockSpec((1, 2 * mapping_dim, tile_wh), lambda j, b: (b, 0, j))
    out_shape = jax.ShapeDtypeStruct((batches, 2 * mapping_dim, wh), x.dtype)

    if phase is None:
        out_flat = pl.pallas_call(
            _gfft_kernel_nophase,
            out_shape=out_shape,
            grid_spec=pltpu.PrefetchScalarGridSpec(
                num_scalar_prefetch=0,
                grid=grid,
                in_specs=[x_spec, bt_spec],
                out_specs=out_spec,
            ),
            compiler_params=compiler_params,
        )(x_flat, bt_scaled)
    else:
        phase_arr = jnp.asarray(phase, dtype=jnp.float32)
        # TODO(synk): tensor-shaped (broadcasting) phase is not supported;
        # scalar phase only, matching the common usage of the module.
        assert phase_arr.ndim == 0, "Only scalar phase is supported."
        phase_arr = jnp.reshape(phase_arr, (1,))
        out_flat = pl.pallas_call(
            _gfft_kernel_phase,
            out_shape=out_shape,
            grid_spec=pltpu.PrefetchScalarGridSpec(
                num_scalar_prefetch=0,
                grid=grid,
                in_specs=[
                    pl.BlockSpec(memory_space=pltpu.SMEM),  # scalar phase
                    x_spec,
                    bt_spec,
                ],
                out_specs=out_spec,
            ),
            compiler_params=compiler_params,
        )(phase_arr, x_flat, bt_scaled)

    # Free reshape back: [B, 2M, W*H] -> [B, 2M, W, H].
    return out_flat.reshape(batches, 2 * mapping_dim, width, height)


def _reference(x, b_mat, phase=None):
    b, c, w, h = x.shape
    xf = jnp.transpose(x, (0, 2, 3, 1)).reshape(b * w * h, c)
    z = xf @ b_mat
    z = z.reshape(b, w, h, b_mat.shape[1])
    z = jnp.transpose(z, (0, 3, 1, 2))
    z = 2.0 * math.pi * z + (0.0 if phase is None else phase)
    return jnp.concatenate([jnp.sin(z), jnp.cos(z)], axis=1)


if __name__ == "__main__":
    key = jax.random.PRNGKey(0)
    k_b, k_x = jax.random.split(key)

    # Module params: num_input_channels=4, mapping_dim=32, scale=10
    num_input_channels = 4
    mapping_dim = 32
    scale = 10.0
    B_mat = (
        jax.random.normal(k_b, (num_input_channels, mapping_dim), dtype=jnp.float32)
        * scale
    )

    # Input: [batch=2, channels=4, width=16, height=16]
    x = jax.random.normal(k_x, (2, 4, 16, 16), dtype=jnp.float32)

    # phase=None path
    out = gaussian_fourier_feature_transform(x, B_mat)
    out = jax.block_until_ready(out)
    ref = _reference(x, B_mat)
    assert out.shape == (2, 2 * mapping_dim, 16, 16), out.shape
    assert jnp.allclose(out, ref, atol=2e-4, rtol=2e-4), (
        float(jnp.max(jnp.abs(out - ref)))
    )

    # scalar-phase path
    out_p = gaussian_fourier_feature_transform(x, B_mat, phase=0.5)
    out_p = jax.block_until_ready(out_p)
    ref_p = _reference(x, B_mat, phase=0.5)
    assert jnp.allclose(out_p, ref_p, atol=2e-4, rtol=2e-4), (
        float(jnp.max(jnp.abs(out_p - ref_p)))
    )

    print("KERNEL_OK")
</pallas_src>

<mosaic_0001>
module attributes {stable_mosaic.version = 11 : i64} {
  func.func @_gfft_kernel_nophase(%arg0: i32, %arg1: i32, %arg2: memref<1x4x256xf32, #tpu.memory_space<vmem>>, %arg3: memref<32x4xf32, #tpu.memory_space<vmem>>, %arg4: memref<1x64x256xf32, #tpu.memory_space<vmem>>) attributes {dimension_semantics = [#tpu.dimension_semantics<parallel>, #tpu.dimension_semantics<parallel>], iteration_bounds = array<i64: 1, 2>, scalar_prefetch = 0 : i64, scratch_operands = 0 : i64, tpu.core_type = #tpu.core_type<tc>, window_params = [{transform_indices = @transform_0, window_bounds = array<i64: 1, 4, 256>}, {pipeline_mode = #tpu.pipeline_mode<synchronous>, transform_indices = @transform_1, window_bounds = array<i64: 32, 4>}, {transform_indices = @transform_2, window_bounds = array<i64: 1, 64, 256>}]} {
    %c0 = arith.constant 0 : index
    %c0_0 = arith.constant 0 : index
    %0 = vector.load %arg3[%c0, %c0_0] : memref<32x4xf32, #tpu.memory_space<vmem>>, vector<32x4xf32>
    %c0_1 = arith.constant 0 : index
    %c0_2 = arith.constant 0 : index
    %c0_3 = arith.constant 0 : index
    %1 = vector.load %arg2[%c0_1, %c0_2, %c0_3] : memref<1x4x256xf32, #tpu.memory_space<vmem>>, vector<1x4x256xf32>
    %2 = vector.shape_cast %1 : vector<1x4x256xf32> to vector<4x256xf32>
    %cst = arith.constant dense<0.000000e+00> : vector<32x256xf32>
    %3 = tpu.matmul %0, %2, %cst {dimension_numbers = #tpu.dot_dimension_numbers<[1], [0], [0], [1], [0, 0, 1, 1], [], []>, precision = #tpu.contract_precision<fp32>} : vector<32x4xf32>, vector<4x256xf32>, vector<32x256xf32> -> vector<32x256xf32>
    %4 = math.sin %3 : vector<32x256xf32>
    %c0_4 = arith.constant 0 : index
    %c0_5 = arith.constant 0 : index
    %c0_6 = arith.constant 0 : index
    %5 = vector.load %arg4[%c0_4, %c0_5, %c0_6] : memref<1x64x256xf32, #tpu.memory_space<vmem>>, vector<1x32x256xf32>
    %6 = vector.shape_cast %5 : vector<1x32x256xf32> to vector<32x256xf32>
    %7 = vector.shape_cast %4 : vector<32x256xf32> to vector<1x32x256xf32>
    tpu.vector_store %arg4[%c0_4, %c0_5, %c0_6], %7 {strides = array<i32>} : memref<1x64x256xf32, #tpu.memory_space<vmem>>, vector<1x32x256xf32>,
    %8 = math.cos %3 : vector<32x256xf32>
    %c0_7 = arith.constant 0 : index
    %c32 = arith.constant 32 : index
    %c0_8 = arith.constant 0 : index
    %9 = vector.load %arg4[%c0_7, %c32, %c0_8] : memref<1x64x256xf32, #tpu.memory_space<vmem>>, vector<1x32x256xf32>
    %10 = vector.shape_cast %9 : vector<1x32x256xf32> to vector<32x256xf32>
    %11 = vector.shape_cast %8 : vector<32x256xf32> to vector<1x32x256xf32>
    tpu.vector_store %arg4[%c0_7, %c32, %c0_8], %11 {strides = array<i32>} : memref<1x64x256xf32, #tpu.memory_space<vmem>>, vector<1x32x256xf32>,
    return
  }
  func.func @transform_0(%arg0: i32, %arg1: i32) -> (i32, i32, i32) {
    %c0_i32 = arith.constant 0 : i32
    %c0_i32_0 = arith.constant 0 : i32
    return %arg1, %c0_i32, %arg0 : i32, i32, i32
  }
  func.func @transform_1(%arg0: i32, %arg1: i32) -> (i32, i32) {
    %c0_i32 = arith.constant 0 : i32
    %c0_i32_0 = arith.constant 0 : i32
    %c0_i32_1 = arith.constant 0 : i32
    return %c0_i32, %c0_i32_0 : i32, i32
  }
  func.func @transform_2(%arg0: i32, %arg1: i32) -> (i32, i32, i32) {
    %c0_i32 = arith.constant 0 : i32
    %c0_i32_0 = arith.constant 0 : i32
    return %arg1, %c0_i32, %arg0 : i32, i32, i32
  }
}

</mosaic_0001>

<llo_original>
// kernel: tpu_custom_call.1
$region0: #{tpu_custom_call.1}
  #allocation0 [shape = 'u32[]', space=smem, size = 0x4, offset = 0x4, fixed_abs, tag = 'smem constant byte address 0x4 - core index']
  #allocation1 [shape = 'u32[72,128]{1,0:T(1,128)}', space=vmem, size = 0x9000, scoped, tag = 'internal scratch']
  %s0 = inlined_call_operand.vmem [shape: f32[2,4,256], index: 0, kind: input, shape index: {}]
  %s1 = inlined_call_operand.vmem [shape: f32[32,4], index: 1, kind: input, shape index: {}]
  %s2 = inlined_call_operand.hbm [shape: f32[2,64,256], index: 2, kind: output, shape index: {}]
  %s3 = sld [smem:[#allocation0]]
  $region41: #{tpu_custom_call.1} parent=0
    _
  %s5 = ssub.s32 1, %s3
  %s6 = scalar_select 0, %s5, %s3
  $region1: #{tpu_custom_call.1} parent=0
    #allocation2 [shape = 'u8[131072]{0}', space=vmem, size = 0x20000, scoped, tag = 'output window, operand 0']
    #allocation3 [shape = 's32[2]{0}', space=sflag, size = 0x8, scoped, tag = 'scoped memory for tpu_custom_call.1']
    %7 = vsyncpa [#allocation3], 0
    %s8 = scalar_lea.sflag [#allocation3], 1
    %9 = vsyncpa %s8, 0
    loop: start=0, step=1, limit=4
    $region2: #{tpu_custom_call.1} parent=1 // loop_pre_header
      _
    $region3: #{tpu_custom_call.1} parent=1 // loop_header
      %s11 = sphi 0, %s15
      %p12 = scmp.ge.s32.totalorder %s11, 4
      %s18 = sphi 0, %s30
      %s19 = sphi 0, %s26
      %s20 = sphi 0, %s18
      %s21 = sphi 0, %s19
      %s22 = sphi 0, %s20
      %s23 = sphi 0, %s21
      %s35 = sphi 0, %s37
      %s38 = sphi 0, %s35
      %s39 = sphi 0, %s38
      %s55 = sphi 0, %s39
      %s59 = sphi 0, %s59
      %s61 = sphi 0, %s59
      %s62 = sphi 0, %s61
      %s76 = sphi 0, %s62
      %s84 = sphi 0, %s86
      %s87 = sphi 0, %s84
      %s88 = sphi 0, %s87
      %s104 = sphi 0, %s88
    $region4: #{tpu_custom_call.1} parent=1 // loop_header_branch
      %14 = sbr.rel (%p12) target = $region8
    $region5: #{tpu_custom_call.1} parent=1 // loop_body
      %s16 = ssub.s32 %s11, 1
      %s17 = ssub.s32 %s11, 2
      %s24 = sadd.s32 1, %s19
      %p25 = scmp.ge.s32.totalorder %s24, 2
      %s26 = scalar_select %p25, 0, %s24
      %s27 = sadd.s32 1, %s18
      %s28 = scalar_select %p25, %s27, %s18
      %p29 = scmp.ge.s32.totalorder %s28, 1
      %s30 = scalar_select %p29, 0, %s28
      %s31 = ssub.s32 %s19, %s26
      %s32 = ssub.s32 %s18, %s30
      %s33 = sor.u32 %s31, %s32
      %p34 = scmp.eq.s32.totalorder %s33, 0
      %s36 = sadd.s32 %s35, 1
      %s37 = scalar_select %p34, %s35, %s36
      %p40 = pneg %p34
      %p41 = scmp.eq.s32.totalorder %s11, 1
      %p42 = por %p40, %p41
      %p43 = scmp.ne.s32.totalorder %s35, %s38
      %p44 = scmp.eq.s32.totalorder %s11, 0
      %p45 = por %p43, %p44
      %p46 = scmp.ne.s32.totalorder %s35, %s38
      %p47 = scmp.eq.s32.totalorder %s16, 1
      %p48 = por %p46, %p47
      %p49 = scmp.ne.s32.totalorder %s38, %s39
      %p50 = scmp.eq.s32.totalorder %s16, 0
      %p51 = por %p49, %p50
      %p52 = scmp.ne.s32.totalorder %s38, %s39
      %p53 = scmp.eq.s32.totalorder %s17, 1
      %p54 = por %p52, %p53
      %p56 = scmp.ne.s32.totalorder %s39, %s55
      %p57 = scmp.eq.s32.totalorder %s17, 0
      %p58 = por %p56, %p57
      %s60 = sadd.s32 %s59, 1
      %p63 = scmp.eq.s32.totalorder %s11, 1
      %p64 = scmp.ne.s32.totalorder %s59, %s61
      %p65 = scmp.eq.s32.totalorder %s11, 0
      %p66 = por %p64, %p65
      %p67 = scmp.ne.s32.totalorder %s59, %s61
      %p68 = scmp.eq.s32.totalorder %s16, 1
      %p69 = por %p67, %p68
      %p70 = scmp.ne.s32.totalorder %s61, %s62
      %p71 = scmp.eq.s32.totalorder %s16, 0
      %p72 = por %p70, %p71
      %p73 = scmp.ne.s32.totalorder %s61, %s62
      %p74 = scmp.eq.s32.totalorder %s17, 1
      %p75 = por %p73, %p74
      %p77 = scmp.ne.s32.totalorder %s62, %s76
      %p78 = scmp.eq.s32.totalorder %s17, 0
      %p79 = por %p77, %p78
      %s80 = ssub.s32 %s19, %s26
      %s81 = ssub.s32 %s18, %s30
      %s82 = sor.u32 %s80, %s81
      %p83 = scmp.eq.s32.totalorder %s82, 0
      %s85 = sadd.s32 %s84, 1
      %s86 = scalar_select %p83, %s84, %s85
      %p89 = pneg %p83
      %p90 = scmp.eq.s32.totalorder %s11, 1
      %p91 = por %p89, %p90
      %p92 = scmp.ne.s32.totalorder %s84, %s87
      %p93 = scmp.eq.s32.totalorder %s11, 0
      %p94 = por %p92, %p93
      %p95 = scmp.ne.s32.totalorder %s84, %s87
      %p96 = scmp.eq.s32.totalorder %s16, 1
      %p97 = por %p95, %p96
      %p98 = scmp.ne.s32.totalorder %s87, %s88
      %p99 = scmp.eq.s32.totalorder %s16, 0
      %p100 = por %p98, %p99
      %p101 = scmp.ne.s32.totalorder %s87, %s88
      %p102 = scmp.eq.s32.totalorder %s17, 1
      %p103 = por %p101, %p102
      %p105 = scmp.ne.s32.totalorder %s88, %s104
      %p106 = scmp.eq.s32.totalorder %s17, 0
      %p107 = por %p105, %p106
      %p108 = scmp.le.s32.totalorder 1, %s11
      %p109 = scmp.lt.s32.totalorder %s11, 3
      %p110 = pnand %p108, %p109
      %p111 = pneg %p110
      // Predicated region
      $region9: #{tpu_custom_call.1} parent=5 // pred_check
        _
      $region10: #{tpu_custom_call.1} parent=5 // pred_check_branch
        %113 = sbr.rel (%p110) target = $region12
      $region11: #{tpu_custom_call.1} parent=5 // pred_region
        %s114 = ssub.s32 %s11, 1
        // Predicated region
        $region13: #{tpu_custom_call.1} parent=11 // pred_check
          %p115 = pneg %p72
        $region14: #{tpu_custom_call.1} parent=11 // pred_check_branch
          %117 = sbr.rel (%p115) target = $region16
        $region15: #{tpu_custom_call.1} parent=11 // pred_region
          _
        $region16: #{tpu_custom_call.1} parent=11 // pred_fallthru
          _
      $region12: #{tpu_custom_call.1} parent=5 // pred_fallthru
        _
      %p118 = scmp.lt.s32.totalorder %s11, 2
      // Predicated region
      $region17: #{tpu_custom_call.1} parent=5 // pred_check
        %p119 = pneg %p118
      $region18: #{tpu_custom_call.1} parent=5 // pred_check_branch
        %121 = sbr.rel (%p119) target = $region20
      $region19: #{tpu_custom_call.1} parent=5 // pred_region
        // Predicated region
        $region21: #{tpu_custom_call.1} parent=19 // pred_check
          %p122 = pneg %p45
        $region22: #{tpu_custom_call.1} parent=19 // pred_check_branch
          %124 = sbr.rel (%p122) target = $region24
        $region23: #{tpu_custom_call.1} parent=19 // pred_region
          %s125 = smul.u32 2, %s18
          %p126 = scmp.lt.s32.totalorder %s19, 1
          %s127 = scalar_select %p126, %s19, 1
          %p128 = scmp.lt.s32.totalorder %s125, 1
          %s129 = scalar_select %p128, %s125, 1
          %s130 = smul.addr %s127, 2
          %s131 = sadd.s32 %s129, %s130
          %s132 = smul.addr %s131, 4
          %s133 = scalar_lea.vmem %s0, %s132
          %s134 = smul.u32 2, %s18
        $region24: #{tpu_custom_call.1} parent=19 // pred_fallthru
          _
      $region20: #{tpu_custom_call.1} parent=5 // pred_fallthru
        _
      %p135 = scmp.le.s32.totalorder 1, %s11
      %p136 = scmp.lt.s32.totalorder %s11, 3
      %p137 = pnand %p135, %p136
      %p138 = pneg %p137
      // Predicated region
      $region25: #{tpu_custom_call.1} parent=5 // pred_check
        _
      $region26: #{tpu_custom_call.1} parent=5 // pred_check_branch
        %140 = sbr.rel (%p137) target = $region28
      $region27: #{tpu_custom_call.1} parent=5 // pred_region
        %s141 = ssub.s32 %s11, 1
        %s142 = smul.u32 2, %s20
        %p143 = scmp.lt.s32.totalorder %s21, 1
        %s144 = scalar_select %p143, %s21, 1
        %p145 = scmp.lt.s32.totalorder %s142, 1
        %s146 = scalar_select %p145, %s142, 1
        %s147 = smul.addr %s144, 2
        %s148 = sadd.s32 %s146, %s147
        %s149 = smul.addr %s148, 4
        %s150 = scalar_lea.vmem %s0, %s149
        %p151 = pneg %p51
        %p152 = pneg %p48
        %p153 = pneg %p72
        %p154 = pneg %p69
        %p155 = pneg %p100
        %p156 = pneg %p97
        %s157 = sand.u32 %s87, 1
        %s158 = scalar_lea.sflag [#allocation3], %s157
        %s159 = sand.u32 %s87, 1
        %s160 = smul.addr %s159, 128
        %s161 = scalar_lea.vmem [#allocation2], %s160
        %s162 = smul.u32 2, %s20
        %p163 = scmp.lt.s32.totalorder %s21, 1
        %s164 = scalar_select %p163, %s21, 1
        %p165 = scmp.lt.s32.totalorder %s162, 1
        %s166 = scalar_select %p165, %s162, 1
        %s167 = smul.addr %s164, 2
        %s168 = sadd.s32 %s166, %s167
        %s169 = smul.addr %s168, 4
        %s170 = scalar_lea.vmem %s0, %s169
        %s171 = smul.u32 2, %s20
        %s172 = smul.u32 2, %s20
        %v173 = vld [vmem:[%s1] sm:$0xff]
        %v174 = vld [vmem:[%s1 + $0x8] sm:$0xff]
        %v175 = vld [vmem:[%s1 + $0x10] sm:$0xff]
        %v176 = vld [vmem:[%s1 + $0x18] sm:$0xff]
        %v177 = vld [vmem:[%s170] sm:$0xff]
        %179 = vst [vmem:[#allocation1] ss:$2 sm:$0xff] %v177
        %v180 = vld.sshfl [vmem:[#allocation1] sm:$0xff pattern:$0x75316420]
        %v181 = vld.sshfl [vmem:[#allocation1 + $0x8] sm:$0xff pattern:$0x75316420]
        %vm182 = vcmask 31744
        %v184 = vsel %vm182, %v173, 0
        %v187 = vsel %vm182, %v174, 0
        %v190 = vsel %vm182, %v175, 0
        %v193 = vsel %vm182, %v176, 0
        %vm195 = vcmask 1043456
        %v196 = vsel %vm195, %v180, 0
        %v198 = vsel %vm195, %v181, 0
        %200 = vmatpush.msra.mxu0 0.0
        %201 = vmatpush.msra.mxu0 0.0
        %202 = vmatpush.msra.mxu0 0.0
        %203 = vmatpush.msra.mxu0 0.0
        %204 = vmatpush.msra.mxu0 0.0
        %205 = vmatpush.msra.mxu0 0.0
        %206 = vmatpush.msra.mxu0 0.0
        %207 = vmatpush.msra.mxu0 0.0
        %208 = vmatpush.msra.mxu0 0.0
        %209 = vmatpush.msra.mxu0 0.0
        %210 = vmatpush.msra.mxu0 0.0
        %211 = vmatpush.msra.mxu0 0.0
        %212 = vmatpush.msra.mxu0 0.0
        %213 = vmatpush.msra.mxu0 0.0
        %214 = vmatpush.msra.mxu0 0.0
        %v215 = vand.u32 %v196, 4294901760
        %216 = vmatpush.msra.mxu0 %v215
        %v217 = vand.u32 %v184, 4294901760
        %v218 = vsub.f32 %v184, %v217
        %v219 = vand.u32 %v218, 4294901760
        %v220 = vsub.f32 %v218, %v219
        %v221 = vand.u32 %v220, 4294901760
        %222 = vmatmul.f32.gmra.mxu0 %v221
        %v223 = vpop.f32.mrf.mxu0
        %v224 = vadd.f32 0.0, %v223
        %v225 = vand.u32 %v187, 4294901760
        %v226 = vsub.f32 %v187, %v225
        %v227 = vand.u32 %v226, 4294901760
        %v228 = vsub.f32 %v226, %v227
        %v229 = vand.u32 %v228, 4294901760
        %230 = vmatmul.f32.gmra.mxu0 %v229
        %v231 = vpop.f32.mrf.mxu0
        %v232 = vadd.f32 0.0, %v231
        %v233 = vand.u32 %v190, 4294901760
        %v234 = vsub.f32 %v190, %v233
        %v235 = vand.u32 %v234, 4294901760
        %v236 = vsub.f32 %v234, %v235
        %v237 = vand.u32 %v236, 4294901760
        %238 = vmatmul.f32.gmra.mxu0 %v237
        %v239 = vpop.f32.mrf.mxu0
        %v240 = vadd.f32 0.0, %v239
        %v241 = vand.u32 %v193, 4294901760
        %v242 = vsub.f32 %v193, %v241
        %v243 = vand.u32 %v242, 4294901760
        %v244 = vsub.f32 %v242, %v243
        %v245 = vand.u32 %v244, 4294901760
        %246 = vmatmul.f32.gmra.mxu0 %v245
        %v247 = vpop.f32.mrf.mxu0
        %v248 = vadd.f32 0.0, %v247
        %249 = vdwg.mxu0
        %250 = vmatpush.msra.mxu0 0.0
        %251 = vmatpush.msra.mxu0 0.0
        %252 = vmatpush.msra.mxu0 0.0
        %253 = vmatpush.msra.mxu0 0.0
        %254 = vmatpush.msra.mxu0 0.0
        %255 = vmatpush.msra.mxu0 0.0
        %256 = vmatpush.msra.mxu0 0.0
        %257 = vmatpush.msra.mxu0 0.0
        %258 = vmatpush.msra.mxu0 0.0
        %259 = vmatpush.msra.mxu0 0.0
        %260 = vmatpush.msra.mxu0 0.0
        %261 = vmatpush.msra.mxu0 0.0
        %262 = vmatpush.msra.mxu0 0.0
        %263 = vmatpush.msra.mxu0 0.0
        %264 = vmatpush.msra.mxu0 0.0
        %v265 = vand.u32 %v196, 4294901760
        %v266 = vsub.f32 %v196, %v265
        %v267 = vand.u32 %v266, 4294901760
        %v268 = vsub.f32 %v266, %v267
        %v269 = vand.u32 %v268, 4294901760
        %270 = vmatpush.msra.mxu0 %v269
        %v271 = vand.u32 %v184, 4294901760
        %272 = vmatmul.f32.gmra.mxu0 %v271
        %v273 = vpop.f32.mrf.mxu0
        %v274 = vadd.f32 %v224, %v273
        %v275 = vand.u32 %v187, 4294901760
        %276 = vmatmul.f32.gmra.mxu0 %v275
        %v277 = vpop.f32.mrf.mxu0
        %v278 = vadd.f32 %v232, %v277
        %v279 = vand.u32 %v190, 4294901760
        %280 = vmatmul.f32.gmra.mxu0 %v279
        %v281 = vpop.f32.mrf.mxu0
        %v282 = vadd.f32 %v240, %v281
        %v283 = vand.u32 %v193, 4294901760
        %284 = vmatmul.f32.gmra.mxu0 %v283
        %v285 = vpop.f32.mrf.mxu0
        %v286 = vadd.f32 %v248, %v285
        %287 = vdwg.mxu0
        %288 = vmatpush.msra.mxu0 0.0
        %289 = vmatpush.msra.mxu0 0.0
        %290 = vmatpush.msra.mxu0 0.0
        %291 = vmatpush.msra.mxu0 0.0
        %292 = vmatpush.msra.mxu0 0.0
        %293 = vmatpush.msra.mxu0 0.0
        %294 = vmatpush.msra.mxu0 0.0
        %295 = vmatpush.msra.mxu0 0.0
        %296 = vmatpush.msra.mxu0 0.0
        %297 = vmatpush.msra.mxu0 0.0
        %298 = vmatpush.msra.mxu0 0.0
        %299 = vmatpush.msra.mxu0 0.0
        %300 = vmatpush.msra.mxu0 0.0
        %301 = vmatpush.msra.mxu0 0.0
        %302 = vmatpush.msra.mxu0 0.0
        %v303 = vand.u32 %v196, 4294901760
        %v304 = vsub.f32 %v196, %v303
        %305 = vmatpush.msra.mxu0 %v304
        %v306 = vand.u32 %v184, 4294901760
        %v307 = vsub.f32 %v184, %v306
        %308 = vmatmul.f32.gmra.mxu0 %v307
        %v309 = vpop.f32.mrf.mxu0
        %v310 = vadd.f32 %v274, %v309
        %v311 = vand.u32 %v187, 4294901760
        %v312 = vsub.f32 %v187, %v311
        %313 = vmatmul.f32.gmra.mxu0 %v312
        %v314 = vpop.f32.mrf.mxu0
        %v315 = vadd.f32 %v278, %v314
        %v316 = vand.u32 %v190, 4294901760
        %v317 = vsub.f32 %v190, %v316
        %318 = vmatmul.f32.gmra.mxu0 %v317
        %v319 = vpop.f32.mrf.mxu0
        %v320 = vadd.f32 %v282, %v319
        %v321 = vand.u32 %v193, 4294901760
        %v322 = vsub.f32 %v193, %v321
        %323 = vmatmul.f32.gmra.mxu0 %v322
        %v324 = vpop.f32.mrf.mxu0
        %v325 = vadd.f32 %v286, %v324
        %326 = vdwg.mxu0
        %327 = vmatpush.msra.mxu0 0.0
        %328 = vmatpush.msra.mxu0 0.0
        %329 = vmatpush.msra.mxu0 0.0
        %330 = vmatpush.msra.mxu0 0.0
        %331 = vmatpush.msra.mxu0 0.0
        %332 = vmatpush.msra.mxu0 0.0
        %333 = vmatpush.msra.mxu0 0.0
        %334 = vmatpush.msra.mxu0 0.0
        %335 = vmatpush.msra.mxu0 0.0
        %336 = vmatpush.msra.mxu0 0.0
        %337 = vmatpush.msra.mxu0 0.0
        %338 = vmatpush.msra.mxu0 0.0
        %339 = vmatpush.msra.mxu0 0.0
        %340 = vmatpush.msra.mxu0 0.0
        %341 = vmatpush.msra.mxu0 0.0
        %v342 = vand.u32 %v196, 4294901760
        %343 = vmatpush.msra.mxu0 %v342
        %v344 = vand.u32 %v184, 4294901760
        %v345 = vsub.f32 %v184, %v344
        %v346 = vand.u32 %v345, 4294901760
        %347 = vmatmul.f32.gmra.mxu0 %v346
        %v348 = vpop.f32.mrf.mxu0
        %v349 = vadd.f32 %v310, %v348
        %v350 = vand.u32 %v187, 4294901760
        %v351 = vsub.f32 %v187, %v350
        %v352 = vand.u32 %v351, 4294901760
        %353 = vmatmul.f32.gmra.mxu0 %v352
        %v354 = vpop.f32.mrf.mxu0
        %v355 = vadd.f32 %v315, %v354
        %v356 = vand.u32 %v190, 4294901760
        %v357 = vsub.f32 %v190, %v356
        %v358 = vand.u32 %v357, 4294901760
        %359 = vmatmul.f32.gmra.mxu0 %v358
        %v360 = vpop.f32.mrf.mxu0
        %v361 = vadd.f32 %v320, %v360
        %v362 = vand.u32 %v193, 4294901760
        %v363 = vsub.f32 %v193, %v362
        %v364 = vand.u32 %v363, 4294901760
        %365 = vmatmul.f32.gmra.mxu0 %v364
        %v366 = vpop.f32.mrf.mxu0
        %v367 = vadd.f32 %v325, %v366
        %368 = vdwg.mxu0
        %369 = vmatpush.msra.mxu0 0.0
        %370 = vmatpush.msra.mxu0 0.0
        %371 = vmatpush.msra.mxu0 0.0
        %372 = vmatpush.msra.mxu0 0.0
        %373 = vmatpush.msra.mxu0 0.0
        %374 = vmatpush.msra.mxu0 0.0
        %375 = vmatpush.msra.mxu0 0.0
        %376 = vmatpush.msra.mxu0 0.0
        %377 = vmatpush.msra.mxu0 0.0
        %378 = vmatpush.msra.mxu0 0.0
        %379 = vmatpush.msra.mxu0 0.0
        %380 = vmatpush.msra.mxu0 0.0
        %381 = vmatpush.msra.mxu0 0.0
        %382 = vmatpush.msra.mxu0 0.0
        %383 = vmatpush.msra.mxu0 0.0
        %v384 = vand.u32 %v196, 4294901760
        %v385 = vsub.f32 %v196, %v384
        %v386 = vand.u32 %v385, 4294901760
        %387 = vmatpush.msra.mxu0 %v386
        %v388 = vand.u32 %v184, 4294901760
        %389 = vmatmul.f32.gmra.mxu0 %v388
        %v390 = vpop.f32.mrf.mxu0
        %v391 = vadd.f32 %v349, %v390
        %v392 = vand.u32 %v187, 4294901760
        %393 = vmatmul.f32.gmra.mxu0 %v392
        %v394 = vpop.f32.mrf.mxu0
        %v395 = vadd.f32 %v355, %v394
        %v396 = vand.u32 %v190, 4294901760
        %397 = vmatmul.f32.gmra.mxu0 %v396
        %v398 = vpop.f32.mrf.mxu0
        %v399 = vadd.f32 %v361, %v398
        %v400 = vand.u32 %v193, 4294901760
        %401 = vmatmul.f32.gmra.mxu0 %v400
        %v402 = vpop.f32.mrf.mxu0
        %v403 = vadd.f32 %v367, %v402
        %404 = vdwg.mxu0
        %405 = vmatpush.msra.mxu0 0.0
        %406 = vmatpush.msra.mxu0 0.0
        %407 = vmatpush.msra.mxu0 0.0
        %408 = vmatpush.msra.mxu0 0.0
        %409 = vmatpush.msra.mxu0 0.0
        %410 = vmatpush.msra.mxu0 0.0
        %411 = vmatpush.msra.mxu0 0.0
        %412 = vmatpush.msra.mxu0 0.0
        %413 = vmatpush.msra.mxu0 0.0
        %414 = vmatpush.msra.mxu0 0.0
        %415 = vmatpush.msra.mxu0 0.0
        %416 = vmatpush.msra.mxu0 0.0
        %417 = vmatpush.msra.mxu0 0.0
        %418 = vmatpush.msra.mxu0 0.0
        %419 = vmatpush.msra.mxu0 0.0
        %v420 = vand.u32 %v196, 4294901760
        %421 = vmatpush.msra.mxu0 %v420
        %v422 = vand.u32 %v184, 4294901760
        %423 = vmatmul.f32.gmra.mxu0 %v422
        %v424 = vpop.f32.mrf.mxu0
        %v425 = vadd.f32 %v391, %v424
        %v426 = vand.u32 %v187, 4294901760
        %427 = vmatmul.f32.gmra.mxu0 %v426
        %v428 = vpop.f32.mrf.mxu0
        %v429 = vadd.f32 %v395, %v428
        %v430 = vand.u32 %v190, 4294901760
        %431 = vmatmul.f32.gmra.mxu0 %v430
        %v432 = vpop.f32.mrf.mxu0
        %v433 = vadd.f32 %v399, %v432
        %v434 = vand.u32 %v193, 4294901760
        %435 = vmatmul.f32.gmra.mxu0 %v434
        %v436 = vpop.f32.mrf.mxu0
        %v437 = vadd.f32 %v403, %v436
        %438 = vdwg.mxu0
        %439 = vmatpush.msra.mxu0 0.0
        %440 = vmatpush.msra.mxu0 0.0
        %441 = vmatpush.msra.mxu0 0.0
        %442 = vmatpush.msra.mxu0 0.0
        %443 = vmatpush.msra.mxu0 0.0
        %444 = vmatpush.msra.mxu0 0.0
        %445 = vmatpush.msra.mxu0 0.0
        %446 = vmatpush.msra.mxu0 0.0
        %447 = vmatpush.msra.mxu0 0.0
        %448 = vmatpush.msra.mxu0 0.0
        %449 = vmatpush.msra.mxu0 0.0
        %450 = vmatpush.msra.mxu0 0.0
        %451 = vmatpush.msra.mxu0 0.0
        %452 = vmatpush.msra.mxu0 0.0
        %453 = vmatpush.msra.mxu0 0.0
        %v454 = vand.u32 %v198, 4294901760
        %455 = vmatpush.msra.mxu0 %v454
        %v456 = vand.u32 %v184, 4294901760
        %v457 = vsub.f32 %v184, %v456
        %v458 = vand.u32 %v457, 4294901760
        %v459 = vsub.f32 %v457, %v458
        %v460 = vand.u32 %v459, 4294901760
        %461 = vmatmul.f32.gmra.mxu0 %v460
        %v462 = vpop.f32.mrf.mxu0
        %v463 = vadd.f32 0.0, %v462
        %v464 = vand.u32 %v187, 4294901760
        %v465 = vsub.f32 %v187, %v464
        %v466 = vand.u32 %v465, 4294901760
        %v467 = vsub.f32 %v465, %v466
        %v468 = vand.u32 %v467, 4294901760
        %469 = vmatmul.f32.gmra.mxu0 %v468
        %v470 = vpop.f32.mrf.mxu0
        %v471 = vadd.f32 0.0, %v470
        %v472 = vand.u32 %v190, 4294901760
        %v473 = vsub.f32 %v190, %v472
        %v474 = vand.u32 %v473, 4294901760
        %v475 = vsub.f32 %v473, %v474
        %v476 = vand.u32 %v475, 4294901760
        %477 = vmatmul.f32.gmra.mxu0 %v476
        %v478 = vpop.f32.mrf.mxu0
        %v479 = vadd.f32 0.0, %v478
        %v480 = vand.u32 %v193, 4294901760
        %v481 = vsub.f32 %v193, %v480
        %v482 = vand.u32 %v481, 4294901760
        %v483 = vsub.f32 %v481, %v482
        %v484 = vand.u32 %v483, 4294901760
        %485 = vmatmul.f32.gmra.mxu0 %v484
        %v486 = vpop.f32.mrf.mxu0
        %v487 = vadd.f32 0.0, %v486
        %488 = vdwg.mxu0
        %489 = vmatpush.msra.mxu0 0.0
        %490 = vmatpush.msra.mxu0 0.0
        %491 = vmatpush.msra.mxu0 0.0
        %492 = vmatpush.msra.mxu0 0.0
        %493 = vmatpush.msra.mxu0 0.0
        %494 = vmatpush.msra.mxu0 0.0
        %495 = vmatpush.msra.mxu0 0.0
        %496 = vmatpush.msra.mxu0 0.0
        %497 = vmatpush.msra.mxu0 0.0
        %498 = vmatpush.msra.mxu0 0.0
        %499 = vmatpush.msra.mxu0 0.0
        %500 = vmatpush.msra.mxu0 0.0
        %501 = vmatpush.msra.mxu0 0.0
        %502 = vmatpush.msra.mxu0 0.0
        %503 = vmatpush.msra.mxu0 0.0
        %v504 = vand.u32 %v198, 4294901760
        %v505 = vsub.f32 %v198, %v504
        %v506 = vand.u32 %v505, 4294901760
        %v507 = vsub.f32 %v505, %v506
        %v508 = vand.u32 %v507, 4294901760
        %509 = vmatpush.msra.mxu0 %v508
        %v510 = vand.u32 %v184, 4294901760
        %511 = vmatmul.f32.gmra.mxu0 %v510
        %v512 = vpop.f32.mrf.mxu0
        %v513 = vadd.f32 %v463, %v512
        %v514 = vand.u32 %v187, 4294901760
        %515 = vmatmul.f32.gmra.mxu0 %v514
        %v516 = vpop.f32.mrf.mxu0
        %v517 = vadd.f32 %v471, %v516
        %v518 = vand.u32 %v190, 4294901760
        %519 = vmatmul.f32.gmra.mxu0 %v518
        %v520 = vpop.f32.mrf.mxu0
        %v521 = vadd.f32 %v479, %v520
        %v522 = vand.u32 %v193, 4294901760
        %523 = vmatmul.f32.gmra.mxu0 %v522
        %v524 = vpop.f32.mrf.mxu0
        %v525 = vadd.f32 %v487, %v524
        %526 = vdwg.mxu0
        %527 = vmatpush.msra.mxu0 0.0
        %528 = vmatpush.msra.mxu0 0.0
        %529 = vmatpush.msra.mxu0 0.0
        %530 = vmatpush.msra.mxu0 0.0
        %531 = vmatpush.msra.mxu0 0.0
        %532 = vmatpush.msra.mxu0 0.0
        %533 = vmatpush.msra.mxu0 0.0
        %534 = vmatpush.msra.mxu0 0.0
        %535 = vmatpush.msra.mxu0 0.0
        %536 = vmatpush.msra.mxu0 0.0
        %537 = vmatpush.msra.mxu0 0.0
        %538 = vmatpush.msra.mxu0 0.0
        %539 = vmatpush.msra.mxu0 0.0
        %540 = vmatpush.msra.mxu0 0.0
        %541 = vmatpush.msra.mxu0 0.0
        %v542 = vand.u32 %v198, 4294901760
        %v543 = vsub.f32 %v198, %v542
        %544 = vmatpush.msra.mxu0 %v543
        %v545 = vand.u32 %v184, 4294901760
        %v546 = vsub.f32 %v184, %v545
        %547 = vmatmul.f32.gmra.mxu0 %v546
        %v548 = vpop.f32.mrf.mxu0
        %v549 = vadd.f32 %v513, %v548
        %v550 = vand.u32 %v187, 4294901760
        %v551 = vsub.f32 %v187, %v550
        %552 = vmatmul.f32.gmra.mxu0 %v551
        %v553 = vpop.f32.mrf.mxu0
        %v554 = vadd.f32 %v517, %v553
        %v555 = vand.u32 %v190, 4294901760
        %v556 = vsub.f32 %v190, %v555
        %557 = vmatmul.f32.gmra.mxu0 %v556
        %v558 = vpop.f32.mrf.mxu0
        %v559 = vadd.f32 %v521, %v558
        %v560 = vand.u32 %v193, 4294901760
        %v561 = vsub.f32 %v193, %v560
        %562 = vmatmul.f32.gmra.mxu0 %v561
        %v563 = vpop.f32.mrf.mxu0
        %v564 = vadd.f32 %v525, %v563
        %565 = vdwg.mxu0
        %566 = vmatpush.msra.mxu0 0.0
        %567 = vmatpush.msra.mxu0 0.0
        %568 = vmatpush.msra.mxu0 0.0
        %569 = vmatpush.msra.mxu0 0.0
        %570 = vmatpush.msra.mxu0 0.0
        %571 = vmatpush.msra.mxu0 0.0
        %572 = vmatpush.msra.mxu0 0.0
        %573 = vmatpush.msra.mxu0 0.0
        %574 = vmatpush.msra.mxu0 0.0
        %575 = vmatpush.msra.mxu0 0.0
        %576 = vmatpush.msra.mxu0 0.0
        %577 = vmatpush.msra.mxu0 0.0
        %578 = vmatpush.msra.mxu0 0.0
        %579 = vmatpush.msra.mxu0 0.0
        %580 = vmatpush.msra.mxu0 0.0
        %v581 = vand.u32 %v198, 4294901760
        %582 = vmatpush.msra.mxu0 %v581
        %v583 = vand.u32 %v184, 4294901760
        %v584 = vsub.f32 %v184, %v583
        %v585 = vand.u32 %v584, 4294901760
        %586 = vmatmul.f32.gmra.mxu0 %v585
        %v587 = vpop.f32.mrf.mxu0
        %v588 = vadd.f32 %v549, %v587
        %v589 = vand.u32 %v187, 4294901760
        %v590 = vsub.f32 %v187, %v589
        %v591 = vand.u32 %v590, 4294901760
        %592 = vmatmul.f32.gmra.mxu0 %v591
        %v593 = vpop.f32.mrf.mxu0
        %v594 = vadd.f32 %v554, %v593
        %v595 = vand.u32 %v190, 4294901760
        %v596 = vsub.f32 %v190, %v595
        %v597 = vand.u32 %v596, 4294901760
        %598 = vmatmul.f32.gmra.mxu0 %v597
        %v599 = vpop.f32.mrf.mxu0
        %v600 = vadd.f32 %v559, %v599
        %v601 = vand.u32 %v193, 4294901760
        %v602 = vsub.f32 %v193, %v601
        %v603 = vand.u32 %v602, 4294901760
        %604 = vmatmul.f32.gmra.mxu0 %v603
        %v605 = vpop.f32.mrf.mxu0
        %v606 = vadd.f32 %v564, %v605
        %607 = vdwg.mxu0
        %608 = vmatpush.msra.mxu0 0.0
        %609 = vmatpush.msra.mxu0 0.0
        %610 = vmatpush.msra.mxu0 0.0
        %611 = vmatpush.msra.mxu0 0.0
        %612 = vmatpush.msra.mxu0 0.0
        %613 = vmatpush.msra.mxu0 0.0
        %614 = vmatpush.msra.mxu0 0.0
        %615 = vmatpush.msra.mxu0 0.0
        %616 = vmatpush.msra.mxu0 0.0
        %617 = vmatpush.msra.mxu0 0.0
        %618 = vmatpush.msra.mxu0 0.0
        %619 = vmatpush.msra.mxu0 0.0
        %620 = vmatpush.msra.mxu0 0.0
        %621 = vmatpush.msra.mxu0 0.0
        %622 = vmatpush.msra.mxu0 0.0
        %v623 = vand.u32 %v198, 4294901760
        %v624 = vsub.f32 %v198, %v623
        %v625 = vand.u32 %v624, 4294901760
        %626 = vmatpush.msra.mxu0 %v625
        %v627 = vand.u32 %v184, 4294901760
        %628 = vmatmul.f32.gmra.mxu0 %v627
        %v629 = vpop.f32.mrf.mxu0
        %v630 = vadd.f32 %v588, %v629
        %v631 = vand.u32 %v187, 4294901760
        %632 = vmatmul.f32.gmra.mxu0 %v631
        %v633 = vpop.f32.mrf.mxu0
        %v634 = vadd.f32 %v594, %v633
        %v635 = vand.u32 %v190, 4294901760
        %636 = vmatmul.f32.gmra.mxu0 %v635
        %v637 = vpop.f32.mrf.mxu0
        %v638 = vadd.f32 %v600, %v637
        %v639 = vand.u32 %v193, 4294901760
        %640 = vmatmul.f32.gmra.mxu0 %v639
        %v641 = vpop.f32.mrf.mxu0
        %v642 = vadd.f32 %v606, %v641
        %643 = vdwg.mxu0
        %644 = vmatpush.msra.mxu0 0.0
        %645 = vmatpush.msra.mxu0 0.0
        %646 = vmatpush.msra.mxu0 0.0
        %647 = vmatpush.msra.mxu0 0.0
        %648 = vmatpush.msra.mxu0 0.0
        %649 = vmatpush.msra.mxu0 0.0
        %650 = vmatpush.msra.mxu0 0.0
        %651 = vmatpush.msra.mxu0 0.0
        %652 = vmatpush.msra.mxu0 0.0
        %653 = vmatpush.msra.mxu0 0.0
        %654 = vmatpush.msra.mxu0 0.0
        %655 = vmatpush.msra.mxu0 0.0
        %656 = vmatpush.msra.mxu0 0.0
        %657 = vmatpush.msra.mxu0 0.0
        %658 = vmatpush.msra.mxu0 0.0
        %v659 = vand.u32 %v198, 4294901760
        %660 = vmatpush.msra.mxu0 %v659
        %v661 = vand.u32 %v184, 4294901760
        %662 = vmatmul.f32.gmra.mxu0 %v661
        %v663 = vpop.f32.mrf.mxu0
        %v664 = vadd.f32 %v630, %v663
        %v665 = vand.u32 %v187, 4294901760
        %666 = vmatmul.f32.gmra.mxu0 %v665
        %v667 = vpop.f32.mrf.mxu0
        %v668 = vadd.f32 %v634, %v667
        %v669 = vand.u32 %v190, 4294901760
        %670 = vmatmul.f32.gmra.mxu0 %v669
        %v671 = vpop.f32.mrf.mxu0
        %v672 = vadd.f32 %v638, %v671
        %v673 = vand.u32 %v193, 4294901760
        %674 = vmatmul.f32.gmra.mxu0 %v673
        %v675 = vpop.f32.mrf.mxu0
        %v676 = vadd.f32 %v642, %v675
        %677 = vdwg.mxu0
        %v678 = vand.u32 2147483647, %v425
        %vm679 = vcmp.le.f32.partialorder %v678, 0.7853982
        %vm680 = vcmp.lt.s32.totalorder %v425, 0
        %v681 = vand.u32 %v425, 2139095040
        %v682 = vshrl.u32 %v681, 23
        %v683 = vsub.s32 %v682, 127
        %v684 = vand.u32 2147483647, %v425
        %v685 = vand.u32 %v684, 8388607
        %v686 = vor.u32 %v685, 8388608
        %v687 = vsub.s32 0, %v686
        %v688 = vadd.s32 %v683, 1
        %vm689 = vcmp.gt.s32.totalorder %v688, 0
        %v690 = vsel %vm689, %v688, 0
        %v691 = vshrl.u32 %v690, 5
        %v692 = vand.u32 %v690, 31
        %v693 = vsub.s32 32, %v692
        %v694 = vshrl.u32 683565275, %v693
        %v695 = vshll.u32 683565275, %v692
        %v696 = vshrl.u32 2475754826, %v693
        %v697 = vor.u32 %v695, %v696
        %v698 = vshll.u32 2475754826, %v692
        %v699 = vshrl.u32 2131351028, %v693
        %v700 = vor.u32 %v698, %v699
        %v701 = vshll.u32 2131351028, %v692
        %v702 = vshrl.u32 2102212464, %v693
        %v703 = vor.u32 %v701, %v702
        %v704 = vshll.u32 2102212464, %v692
        %v705 = vshrl.u32 920167782, %v693
        %v706 = vor.u32 %v704, %v705
        %v707 = vshll.u32 920167782, %v692
        %v708 = vshrl.u32 1326507024, %v693
        %v709 = vor.u32 %v707, %v708
        %vm710 = vcmp.lt.s32.totalorder %v691, 1
        %vm711 = vcmp.lt.s32.totalorder %v691, 2
        %vm712 = vcmp.lt.s32.totalorder %v691, 3
        %vm713 = vcmp.lt.s32.totalorder %v691, 4
        %v714 = vsel %vm710, %v694, %v697
        %v715 = vsel %vm713, %v703, 2102212464
        %v716 = vsel %vm712, %v700, %v715
        %v717 = vsel %vm711, %v714, %v716
        %v718 = vsel %vm710, %v697, %v700
        %v719 = vsel %vm713, %v706, 920167782
        %v720 = vsel %vm712, %v703, %v719
        %v721 = vsel %vm711, %v718, %v720
        %v722 = vsel %vm710, %v700, %v703
        %v723 = vsel %vm713, %v709, 1326507024
        %v724 = vsel %vm712, %v706, %v723
        %v725 = vsel %vm711, %v722, %v724
        %v726 = vshll.u32 %v686, 8
        %v727 = vand.u32 %v726, 65535
        %v728 = vshrl.u32 %v726, 16
        %v729 = vand.u32 %v725, 65535
        %v730 = vshrl.u32 %v725, 16
        %v731 = vmul.u32 %v727, %v729
        %v732 = vmul.u32 %v727, %v730
        %v733 = vmul.u32 %v728, %v729
        %v734 = vmul.u32 %v728, %v730
        %v735 = vshll.u32 %v732, 16
        %v736 = vshrl.u32 %v732, 16
        %v737 = vshll.u32 %v733, 16
        %v738 = vshrl.u32 %v733, 16
        %vm739 = vc.u32 %v731, %v735
        %v740 = vsel %vm739, 1, 0
        %v741 = vadd.s32 %v731, %v735
        %v742 = vadd.s32 %v734, %v740
        %vm743 = vc.u32 %v741, %v737
        %v744 = vsel %vm743, 1, 0
        %v745 = vadd.s32 %v741, %v737
        %v746 = vadd.s32 %v742, %v744
        %v747 = vadd.s32 %v746, %v736
        %v748 = vadd.s32 %v747, %v738
        %v749 = vand.u32 %v726, 65535
        %v750 = vshrl.u32 %v726, 16
        %v751 = vand.u32 %v721, 65535
        %v752 = vshrl.u32 %v721, 16
        %v753 = vmul.u32 %v749, %v751
        %v754 = vmul.u32 %v749, %v752
        %v755 = vmul.u32 %v750, %v751
        %v756 = vmul.u32 %v750, %v752
        %v757 = vshll.u32 %v754, 16
        %v758 = vshrl.u32 %v754, 16
        %v759 = vshll.u32 %v755, 16
        %v760 = vshrl.u32 %v755, 16
        %vm761 = vc.u32 %v753, %v757
        %v762 = vsel %vm761, 1, 0
        %v763 = vadd.s32 %v753, %v757
        %v764 = vadd.s32 %v756, %v762
        %vm765 = vc.u32 %v763, %v759
        %v766 = vsel %vm765, 1, 0
        %v767 = vadd.s32 %v763, %v759
        %v768 = vadd.s32 %v764, %v766
        %v769 = vadd.s32 %v768, %v758
        %v770 = vadd.s32 %v769, %v760
        %v771 = vmul.u32 %v726, %v717
        %v772 = vadd.s32 %v748, %v767
        %vm773 = vc.u32 %v748, %v767
        %v774 = vadd.s32 %v770, 1
        %v775 = vsel %vm773, %v774, %v770
        %v776 = vadd.s32 %v771, %v775
        %v777 = vadd.s32 %v776, 536870912
        %v778 = vshrl.u32 %v777, 30
        %v779 = vshll.u32 %v778, 30
        %v780 = vsub.s32 %v776, %v779
        %vm781 = vcmp.lt.s32.totalorder %v780, 0
        %v782 = vsub.s32 0, %v780
        %v783 = vsel %vm781, %v782, %v780
        %v784 = vclz %v783
        %v785 = vsub.s32 %v784, 2
        %vm786 = vcmp.gt.s32.totalorder 0, %v785
        %v787 = vsel %vm786, 0, %v785
        %v788 = vsub.s32 32, %v787
        %v789 = vshll.u32 %v780, %v787
        %v790 = vshrl.u32 %v772, %v788
        %v791 = vor.u32 %v789, %v790
        %v792 = vsub.s32 4294967266, %v787
        %v793 = vadd.s32 %v792, 127
        %v794 = vshll.u32 %v793, 23
        %v795 = vor.u32 4788187, %v794
        %v796 = vand.u32 2147483647, %v795
        %v798 = vcvt.s32.f32 %v791
        %v799 = vmul.f32 %v798, %v796
        %v800 = vxor.u32 %v799, 2147483648
        %v801 = vsel %vm680, %v800, %v799
        %v802 = vsub.s32 4, %v778
        %v803 = vsel %vm680, %v802, %v778
        %v804 = vsel %vm679, %v425, %v801
        %v805 = vsel %vm679, 0, %v803
        %v806 = vmul.f32 %v804, %v804
        %v807 = vmul.f32 %v806, -0.001358992
        %v808 = vadd.f32 %v807, 0.041655596
        %v809 = vmul.f32 %v806, %v808
        %v810 = vadd.f32 %v809, -0.4999988
        %v811 = vmul.f32 %v806, %v810
        %v812 = vadd.f32 1.0, %v811
        %v813 = vmul.f32 %v804, %v804
        %v814 = vmul.f32 %v813, -0.00019511016
        %v815 = vadd.f32 %v814, 0.008332121
        %v816 = vmul.f32 %v813, %v815
        %v817 = vadd.f32 %v816, -0.16666654
        %v818 = vmul.f32 %v813, %v817
        %v819 = vadd.f32 %v818, 1.0
        %v820 = vmul.f32 %v819, %v804
        %vm821 = vweird.f32 %v425
        %v822 = vadd.s32 %v805, 3
        %v823 = vand.u32 %v822, 3
        %vm824 = vcmp.lt.s32.totalorder %v823, 2
        %vm825 = vcmp.eq.s32.totalorder %v823, 0
        %v826 = vxor.u32 %v820, 2147483648
        %v827 = vsel %vm825, %v812, %v826
        %vm828 = vcmp.eq.s32.totalorder %v823, 2
        %v829 = vxor.u32 %v812, 2147483648
        %v830 = vsel %vm828, %v829, %v820
        %v831 = vsel %vm824, %v827, %v830
        %v832 = vsel %vm821, nan, %v831
        %v833 = vand.u32 2147483647, %v664
        %vm834 = vcmp.le.f32.partialorder %v833, 0.7853982
        %vm835 = vcmp.lt.s32.totalorder %v664, 0
        %v836 = vand.u32 %v664, 2139095040
        %v837 = vshrl.u32 %v836, 23
        %v838 = vsub.s32 %v837, 127
        %v839 = vand.u32 2147483647, %v664
        %v840 = vand.u32 %v839, 8388607
        %v841 = vor.u32 %v840, 8388608
        %v842 = vsub.s32 0, %v841
        %v843 = vadd.s32 %v838, 1
        %vm844 = vcmp.gt.s32.totalorder %v843, 0
        %v845 = vsel %vm844, %v843, 0
        %v846 = vshrl.u32 %v845, 5
        %v847 = vand.u32 %v845, 31
        %v848 = vsub.s32 32, %v847
        %v849 = vshrl.u32 683565275, %v848
        %v850 = vshll.u32 683565275, %v847
        %v851 = vshrl.u32 2475754826, %v848
        %v852 = vor.u32 %v850, %v851
        %v853 = vshll.u32 2475754826, %v847
        %v854 = vshrl.u32 2131351028, %v848
        %v855 = vor.u32 %v853, %v854
        %v856 = vshll.u32 2131351028, %v847
        %v857 = vshrl.u32 2102212464, %v848
        %v858 = vor.u32 %v856, %v857
        %v859 = vshll.u32 2102212464, %v847
        %v860 = vshrl.u32 920167782, %v848
        %v861 = vor.u32 %v859, %v860
        %v862 = vshll.u32 920167782, %v847
        %v863 = vshrl.u32 1326507024, %v848
        %v864 = vor.u32 %v862, %v863
        %vm865 = vcmp.lt.s32.totalorder %v846, 1
        %vm866 = vcmp.lt.s32.totalorder %v846, 2
        %vm867 = vcmp.lt.s32.totalorder %v846, 3
        %vm868 = vcmp.lt.s32.totalorder %v846, 4
        %v869 = vsel %vm865, %v849, %v852
        %v870 = vsel %vm868, %v858, 2102212464
        %v871 = vsel %vm867, %v855, %v870
        %v872 = vsel %vm866, %v869, %v871
        %v873 = vsel %vm865, %v852, %v855
        %v874 = vsel %vm868, %v861, 920167782
        %v875 = vsel %vm867, %v858, %v874
        %v876 = vsel %vm866, %v873, %v875
        %v877 = vsel %vm865, %v855, %v858
        %v878 = vsel %vm868, %v864, 1326507024
        %v879 = vsel %vm867, %v861, %v878
        %v880 = vsel %vm866, %v877, %v879
        %v881 = vshll.u32 %v841, 8
        %v882 = vand.u32 %v881, 65535
        %v883 = vshrl.u32 %v881, 16
        %v884 = vand.u32 %v880, 65535
        %v885 = vshrl.u32 %v880, 16
        %v886 = vmul.u32 %v882, %v884
        %v887 = vmul.u32 %v882, %v885
        %v888 = vmul.u32 %v883, %v884
        %v889 = vmul.u32 %v883, %v885
        %v890 = vshll.u32 %v887, 16
        %v891 = vshrl.u32 %v887, 16
        %v892 = vshll.u32 %v888, 16
        %v893 = vshrl.u32 %v888, 16
        %vm894 = vc.u32 %v886, %v890
        %v895 = vsel %vm894, 1, 0
        %v896 = vadd.s32 %v886, %v890
        %v897 = vadd.s32 %v889, %v895
        %vm898 = vc.u32 %v896, %v892
        %v899 = vsel %vm898, 1, 0
        %v900 = vadd.s32 %v896, %v892
        %v901 = vadd.s32 %v897, %v899
        %v902 = vadd.s32 %v901, %v891
        %v903 = vadd.s32 %v902, %v893
        %v904 = vand.u32 %v881, 65535
        %v905 = vshrl.u32 %v881, 16
        %v906 = vand.u32 %v876, 65535
        %v907 = vshrl.u32 %v876, 16
        %v908 = vmul.u32 %v904, %v906
        %v909 = vmul.u32 %v904, %v907
        %v910 = vmul.u32 %v905, %v906
        %v911 = vmul.u32 %v905, %v907
        %v912 = vshll.u32 %v909, 16
        %v913 = vshrl.u32 %v909, 16
        %v914 = vshll.u32 %v910, 16
        %v915 = vshrl.u32 %v910, 16
        %vm916 = vc.u32 %v908, %v912
        %v917 = vsel %vm916, 1, 0
        %v918 = vadd.s32 %v908, %v912
        %v919 = vadd.s32 %v911, %v917
        %vm920 = vc.u32 %v918, %v914
        %v921 = vsel %vm920, 1, 0
        %v922 = vadd.s32 %v918, %v914
        %v923 = vadd.s32 %v919, %v921
        %v924 = vadd.s32 %v923, %v913
        %v925 = vadd.s32 %v924, %v915
        %v926 = vmul.u32 %v881, %v872
        %v927 = vadd.s32 %v903, %v922
        %vm928 = vc.u32 %v903, %v922
        %v929 = vadd.s32 %v925, 1
        %v930 = vsel %vm928, %v929, %v925
        %v931 = vadd.s32 %v926, %v930
        %v932 = vadd.s32 %v931, 536870912
        %v933 = vshrl.u32 %v932, 30
        %v934 = vshll.u32 %v933, 30
        %v935 = vsub.s32 %v931, %v934
        %vm936 = vcmp.lt.s32.totalorder %v935, 0
        %v937 = vsub.s32 0, %v935
        %v938 = vsel %vm936, %v937, %v935
        %v939 = vclz %v938
        %v940 = vsub.s32 %v939, 2
        %vm941 = vcmp.gt.s32.totalorder 0, %v940
        %v942 = vsel %vm941, 0, %v940
        %v943 = vsub.s32 32, %v942
        %v944 = vshll.u32 %v935, %v942
        %v945 = vshrl.u32 %v927, %v943
        %v946 = vor.u32 %v944, %v945
        %v947 = vsub.s32 4294967266, %v942
        %v948 = vadd.s32 %v947, 127
        %v949 = vshll.u32 %v948, 23
        %v950 = vor.u32 4788187, %v949
        %v951 = vand.u32 2147483647, %v950
        %v953 = vcvt.s32.f32 %v946
        %v954 = vmul.f32 %v953, %v951
        %v955 = vxor.u32 %v954, 2147483648
        %v956 = vsel %vm835, %v955, %v954
        %v957 = vsub.s32 4, %v933
        %v958 = vsel %vm835, %v957, %v933
        %v959 = vsel %vm834, %v664, %v956
        %v960 = vsel %vm834, 0, %v958
        %v961 = vmul.f32 %v959, %v959
        %v962 = vmul.f32 %v961, -0.001358992
        %v963 = vadd.f32 %v962, 0.041655596
        %v964 = vmul.f32 %v961, %v963
        %v965 = vadd.f32 %v964, -0.4999988
        %v966 = vmul.f32 %v961, %v965
        %v967 = vadd.f32 1.0, %v966
        %v968 = vmul.f32 %v959, %v959
        %v969 = vmul.f32 %v968, -0.00019511016
        %v970 = vadd.f32 %v969, 0.008332121
        %v971 = vmul.f32 %v968, %v970
        %v972 = vadd.f32 %v971, -0.16666654
        %v973 = vmul.f32 %v968, %v972
        %v974 = vadd.f32 %v973, 1.0
        %v975 = vmul.f32 %v974, %v959
        %vm976 = vweird.f32 %v664
        %v977 = vadd.s32 %v960, 3
        %v978 = vand.u32 %v977, 3
        %vm979 = vcmp.lt.s32.totalorder %v978, 2
        %vm980 = vcmp.eq.s32.totalorder %v978, 0
        %v981 = vxor.u32 %v975, 2147483648
        %v982 = vsel %vm980, %v967, %v981
        %vm983 = vcmp.eq.s32.totalorder %v978, 2
        %v984 = vxor.u32 %v967, 2147483648
        %v985 = vsel %vm983, %v984, %v975
        %v986 = vsel %vm979, %v982, %v985
        %v987 = vsel %vm976, nan, %v986
        %v988 = vand.u32 2147483647, %v429
        %vm989 = vcmp.le.f32.partialorder %v988, 0.7853982
        %vm990 = vcmp.lt.s32.totalorder %v429, 0
        %v991 = vand.u32 %v429, 2139095040
        %v992 = vshrl.u32 %v991, 23
        %v993 = vsub.s32 %v992, 127
        %v994 = vand.u32 2147483647, %v429
        %v995 = vand.u32 %v994, 8388607
        %v996 = vor.u32 %v995, 8388608
        %v997 = vsub.s32 0, %v996
        %v998 = vadd.s32 %v993, 1
        %vm999 = vcmp.gt.s32.totalorder %v998, 0
        %v1000 = vsel %vm999, %v998, 0
        %v1001 = vshrl.u32 %v1000, 5
        %v1002 = vand.u32 %v1000, 31
        %v1003 = vsub.s32 32, %v1002
        %v1004 = vshrl.u32 683565275, %v1003
        %v1005 = vshll.u32 683565275, %v1002
        %v1006 = vshrl.u32 2475754826, %v1003
        %v1007 = vor.u32 %v1005, %v1006
        %v1008 = vshll.u32 2475754826, %v1002
        %v1009 = vshrl.u32 2131351028, %v1003
        %v1010 = vor.u32 %v1008, %v1009
        %v1011 = vshll.u32 2131351028, %v1002
        %v1012 = vshrl.u32 2102212464, %v1003
        %v1013 = vor.u32 %v1011, %v1012
        %v1014 = vshll.u32 2102212464, %v1002
        %v1015 = vshrl.u32 920167782, %v1003
        %v1016 = vor.u32 %v1014, %v1015
        %v1017 = vshll.u32 920167782, %v1002
        %v1018 = vshrl.u32 1326507024, %v1003
        %v1019 = vor.u32 %v1017, %v1018
        %vm1020 = vcmp.lt.s32.totalorder %v1001, 1
        %vm1021 = vcmp.lt.s32.totalorder %v1001, 2
        %vm1022 = vcmp.lt.s32.totalorder %v1001, 3
        %vm1023 = vcmp.lt.s32.totalorder %v1001, 4
        %v1024 = vsel %vm1020, %v1004, %v1007
        %v1025 = vsel %vm1023, %v1013, 2102212464
        %v1026 = vsel %vm1022, %v1010, %v1025
        %v1027 = vsel %vm1021, %v1024, %v1026
        %v1028 = vsel %vm1020, %v1007, %v1010
        %v1029 = vsel %vm1023, %v1016, 920167782
        %v1030 = vsel %vm1022, %v1013, %v1029
        %v1031 = vsel %vm1021, %v1028, %v1030
        %v1032 = vsel %vm1020, %v1010, %v1013
        %v1033 = vsel %vm1023, %v1019, 1326507024
        %v1034 = vsel %vm1022, %v1016, %v1033
        %v1035 = vsel %vm1021, %v1032, %v1034
        %v1036 = vshll.u32 %v996, 8
        %v1037 = vand.u32 %v1036, 65535
        %v1038 = vshrl.u32 %v1036, 16
        %v1039 = vand.u32 %v1035, 65535
        %v1040 = vshrl.u32 %v1035, 16
        %v1041 = vmul.u32 %v1037, %v1039
        %v1042 = vmul.u32 %v1037, %v1040
        %v1043 = vmul.u32 %v1038, %v1039
        %v1044 = vmul.u32 %v1038, %v1040
        %v1045 = vshll.u32 %v1042, 16
        %v1046 = vshrl.u32 %v1042, 16
        %v1047 = vshll.u32 %v1043, 16
        %v1048 = vshrl.u32 %v1043, 16
        %vm1049 = vc.u32 %v1041, %v1045
        %v1050 = vsel %vm1049, 1, 0
        %v1051 = vadd.s32 %v1041, %v1045
        %v1052 = vadd.s32 %v1044, %v1050
        %vm1053 = vc.u32 %v1051, %v1047
        %v1054 = vsel %vm1053, 1, 0
        %v1055 = vadd.s32 %v1051, %v1047
        %v1056 = vadd.s32 %v1052, %v1054
        %v1057 = vadd.s32 %v1056, %v1046
        %v1058 = vadd.s32 %v1057, %v1048
        %v1059 = vand.u32 %v1036, 65535
        %v1060 = vshrl.u32 %v1036, 16
        %v1061 = vand.u32 %v1031, 65535
        %v1062 = vshrl.u32 %v1031, 16
        %v1063 = vmul.u32 %v1059, %v1061
        %v1064 = vmul.u32 %v1059, %v1062
        %v1065 = vmul.u32 %v1060, %v1061
        %v1066 = vmul.u32 %v1060, %v1062
        %v1067 = vshll.u32 %v1064, 16
        %v1068 = vshrl.u32 %v1064, 16
        %v1069 = vshll.u32 %v1065, 16
        %v1070 = vshrl.u32 %v1065, 16
        %vm1071 = vc.u32 %v1063, %v1067
        %v1072 = vsel %vm1071, 1, 0
        %v1073 = vadd.s32 %v1063, %v1067
        %v1074 = vadd.s32 %v1066, %v1072
        %vm1075 = vc.u32 %v1073, %v1069
        %v1076 = vsel %vm1075, 1, 0
        %v1077 = vadd.s32 %v1073, %v1069
        %v1078 = vadd.s32 %v1074, %v1076
        %v1079 = vadd.s32 %v1078, %v1068
        %v1080 = vadd.s32 %v1079, %v1070
        %v1081 = vmul.u32 %v1036, %v1027
        %v1082 = vadd.s32 %v1058, %v1077
        %vm1083 = vc.u32 %v1058, %v1077
        %v1084 = vadd.s32 %v1080, 1
        %v1085 = vsel %vm1083, %v1084, %v1080
        %v1086 = vadd.s32 %v1081, %v1085
        %v1087 = vadd.s32 %v1086, 536870912
        %v1088 = vshrl.u32 %v1087, 30
        %v1089 = vshll.u32 %v1088, 30
        %v1090 = vsub.s32 %v1086, %v1089
        %vm1091 = vcmp.lt.s32.totalorder %v1090, 0
        %v1092 = vsub.s32 0, %v1090
        %v1093 = vsel %vm1091, %v1092, %v1090
        %v1094 = vclz %v1093
        %v1095 = vsub.s32 %v1094, 2
        %vm1096 = vcmp.gt.s32.totalorder 0, %v1095
        %v1097 = vsel %vm1096, 0, %v1095
        %v1098 = vsub.s32 32, %v1097
        %v1099 = vshll.u32 %v1090, %v1097
        %v1100 = vshrl.u32 %v1082, %v1098
        %v1101 = vor.u32 %v1099, %v1100
        %v1102 = vsub.s32 4294967266, %v1097
        %v1103 = vadd.s32 %v1102, 127
        %v1104 = vshll.u32 %v1103, 23
        %v1105 = vor.u32 4788187, %v1104
        %v1106 = vand.u32 2147483647, %v1105
        %v1108 = vcvt.s32.f32 %v1101
        %v1109 = vmul.f32 %v1108, %v1106
        %v1110 = vxor.u32 %v1109, 2147483648
        %v1111 = vsel %vm990, %v1110, %v1109
        %v1112 = vsub.s32 4, %v1088
        %v1113 = vsel %vm990, %v1112, %v1088
        %v1114 = vsel %vm989, %v429, %v1111
        %v1115 = vsel %vm989, 0, %v1113
        %v1116 = vmul.f32 %v1114, %v1114
        %v1117 = vmul.f32 %v1116, -0.001358992
        %v1118 = vadd.f32 %v1117, 0.041655596
        %v1119 = vmul.f32 %v1116, %v1118
        %v1120 = vadd.f32 %v1119, -0.4999988
        %v1121 = vmul.f32 %v1116, %v1120
        %v1122 = vadd.f32 1.0, %v1121
        %v1123 = vmul.f32 %v1114, %v1114
        %v1124 = vmul.f32 %v1123, -0.00019511016
        %v1125 = vadd.f32 %v1124, 0.008332121
        %v1126 = vmul.f32 %v1123, %v1125
        %v1127 = vadd.f32 %v1126, -0.16666654
        %v1128 = vmul.f32 %v1123, %v1127
        %v1129 = vadd.f32 %v1128, 1.0
        %v1130 = vmul.f32 %v1129, %v1114
        %vm1131 = vweird.f32 %v429
        %v1132 = vadd.s32 %v1115, 3
        %v1133 = vand.u32 %v1132, 3
        %vm1134 = vcmp.lt.s32.totalorder %v1133, 2
        %vm1135 = vcmp.eq.s32.totalorder %v1133, 0
        %v1136 = vxor.u32 %v1130, 2147483648
        %v1137 = vsel %vm1135, %v1122, %v1136
        %vm1138 = vcmp.eq.s32.totalorder %v1133, 2
        %v1139 = vxor.u32 %v1122, 2147483648
        %v1140 = vsel %vm1138, %v1139, %v1130
        %v1141 = vsel %vm1134, %v1137, %v1140
        %v1142 = vsel %vm1131, nan, %v1141
        %v1143 = vand.u32 2147483647, %v668
        %vm1144 = vcmp.le.f32.partialorder %v1143, 0.7853982
        %vm1145 = vcmp.lt.s32.totalorder %v668, 0
        %v1146 = vand.u32 %v668, 2139095040
        %v1147 = vshrl.u32 %v1146, 23
        %v1148 = vsub.s32 %v1147, 127
        %v1149 = vand.u32 2147483647, %v668
        %v1150 = vand.u32 %v1149, 8388607
        %v1151 = vor.u32 %v1150, 8388608
        %v1152 = vsub.s32 0, %v1151
        %v1153 = vadd.s32 %v1148, 1
        %vm1154 = vcmp.gt.s32.totalorder %v1153, 0
        %v1155 = vsel %vm1154, %v1153, 0
        %v1156 = vshrl.u32 %v1155, 5
        %v1157 = vand.u32 %v1155, 31
        %v1158 = vsub.s32 32, %v1157
        %v1159 = vshrl.u32 683565275, %v1158
        %v1160 = vshll.u32 683565275, %v1157
        %v1161 = vshrl.u32 2475754826, %v1158
        %v1162 = vor.u32 %v1160, %v1161
        %v1163 = vshll.u32 2475754826, %v1157
        %v1164 = vshrl.u32 2131351028, %v1158
        %v1165 = vor.u32 %v1163, %v1164
        %v1166 = vshll.u32 2131351028, %v1157
        %v1167 = vshrl.u32 2102212464, %v1158
        %v1168 = vor.u32 %v1166, %v1167
        %v1169 = vshll.u32 2102212464, %v1157
        %v1170 = vshrl.u32 920167782, %v1158
        %v1171 = vor.u32 %v1169, %v1170
        %v1172 = vshll.u32 920167782, %v1157
        %v1173 = vshrl.u32 1326507024, %v1158
        %v1174 = vor.u32 %v1172, %v1173
        %vm1175 = vcmp.lt.s32.totalorder %v1156, 1
        %vm1176 = vcmp.lt.s32.totalorder %v1156, 2
        %vm1177 = vcmp.lt.s32.totalorder %v1156, 3
        %vm1178 = vcmp.lt.s32.totalorder %v1156, 4
        %v1179 = vsel %vm1175, %v1159, %v1162
        %v1180 = vsel %vm1178, %v1168, 2102212464
        %v1181 = vsel %vm1177, %v1165, %v1180
        %v1182 = vsel %vm1176, %v1179, %v1181
        %v1183 = vsel %vm1175, %v1162, %v1165
        %v1184 = vsel %vm1178, %v1171, 920167782
        %v1185 = vsel %vm1177, %v1168, %v1184
        %v1186 = vsel %vm1176, %v1183, %v1185
        %v1187 = vsel %vm1175, %v1165, %v1168
        %v1188 = vsel %vm1178, %v1174, 1326507024
        %v1189 = vsel %vm1177, %v1171, %v1188
        %v1190 = vsel %vm1176, %v1187, %v1189
        %v1191 = vshll.u32 %v1151, 8
        %v1192 = vand.u32 %v1191, 65535
        %v1193 = vshrl.u32 %v1191, 16
        %v1194 = vand.u32 %v1190, 65535
        %v1195 = vshrl.u32 %v1190, 16
        %v1196 = vmul.u32 %v1192, %v1194
        %v1197 = vmul.u32 %v1192, %v1195
        %v1198 = vmul.u32 %v1193, %v1194
        %v1199 = vmul.u32 %v1193, %v1195
        %v1200 = vshll.u32 %v1197, 16
        %v1201 = vshrl.u32 %v1197, 16
        %v1202 = vshll.u32 %v1198, 16
        %v1203 = vshrl.u32 %v1198, 16
        %vm1204 = vc.u32 %v1196, %v1200
        %v1205 = vsel %vm1204, 1, 0
        %v1206 = vadd.s32 %v1196, %v1200
        %v1207 = vadd.s32 %v1199, %v1205
        %vm1208 = vc.u32 %v1206, %v1202
        %v1209 = vsel %vm1208, 1, 0
        %v1210 = vadd.s32 %v1206, %v1202
        %v1211 = vadd.s32 %v1207, %v1209
        %v1212 = vadd.s32 %v1211, %v1201
        %v1213 = vadd.s32 %v1212, %v1203
        %v1214 = vand.u32 %v1191, 65535
        %v1215 = vshrl.u32 %v1191, 16
        %v1216 = vand.u32 %v1186, 65535
        %v1217 = vshrl.u32 %v1186, 16
        %v1218 = vmul.u32 %v1214, %v1216
        %v1219 = vmul.u32 %v1214, %v1217
        %v1220 = vmul.u32 %v1215, %v1216
        %v1221 = vmul.u32 %v1215, %v1217
        %v1222 = vshll.u32 %v1219, 16
        %v1223 = vshrl.u32 %v1219, 16
        %v1224 = vshll.u32 %v1220, 16
        %v1225 = vshrl.u32 %v1220, 16
        %vm1226 = vc.u32 %v1218, %v1222
        %v1227 = vsel %vm1226, 1, 0
        %v1228 = vadd.s32 %v1218, %v1222
        %v1229 = vadd.s32 %v1221, %v1227
        %vm1230 = vc.u32 %v1228, %v1224
        %v1231 = vsel %vm1230, 1, 0
        %v1232 = vadd.s32 %v1228, %v1224
        %v1233 = vadd.s32 %v1229, %v1231
        %v1234 = vadd.s32 %v1233, %v1223
        %v1235 = vadd.s32 %v1234, %v1225
        %v1236 = vmul.u32 %v1191, %v1182
        %v1237 = vadd.s32 %v1213, %v1232
        %vm1238 = vc.u32 %v1213, %v1232
        %v1239 = vadd.s32 %v1235, 1
        %v1240 = vsel %vm1238, %v1239, %v1235
        %v1241 = vadd.s32 %v1236, %v1240
        %v1242 = vadd.s32 %v1241, 536870912
        %v1243 = vshrl.u32 %v1242, 30
        %v1244 = vshll.u32 %v1243, 30
        %v1245 = vsub.s32 %v1241, %v1244
        %vm1246 = vcmp.lt.s32.totalorder %v1245, 0
        %v1247 = vsub.s32 0, %v1245
        %v1248 = vsel %vm1246, %v1247, %v1245
        %v1249 = vclz %v1248
        %v1250 = vsub.s32 %v1249, 2
        %vm1251 = vcmp.gt.s32.totalorder 0, %v1250
        %v1252 = vsel %vm1251, 0, %v1250
        %v1253 = vsub.s32 32, %v1252
        %v1254 = vshll.u32 %v1245, %v1252
        %v1255 = vshrl.u32 %v1237, %v1253
        %v1256 = vor.u32 %v1254, %v1255
        %v1257 = vsub.s32 4294967266, %v1252
        %v1258 = vadd.s32 %v1257, 127
        %v1259 = vshll.u32 %v1258, 23
        %v1260 = vor.u32 4788187, %v1259
        %v1261 = vand.u32 2147483647, %v1260
        %v1263 = vcvt.s32.f32 %v1256
        %v1264 = vmul.f32 %v1263, %v1261
        %v1265 = vxor.u32 %v1264, 2147483648
        %v1266 = vsel %vm1145, %v1265, %v1264
        %v1267 = vsub.s32 4, %v1243
        %v1268 = vsel %vm1145, %v1267, %v1243
        %v1269 = vsel %vm1144, %v668, %v1266
        %v1270 = vsel %vm1144, 0, %v1268
        %v1271 = vmul.f32 %v1269, %v1269
        %v1272 = vmul.f32 %v1271, -0.001358992
        %v1273 = vadd.f32 %v1272, 0.041655596
        %v1274 = vmul.f32 %v1271, %v1273
        %v1275 = vadd.f32 %v1274, -0.4999988
        %v1276 = vmul.f32 %v1271, %v1275
        %v1277 = vadd.f32 1.0, %v1276
        %v1278 = vmul.f32 %v1269, %v1269
        %v1279 = vmul.f32 %v1278, -0.00019511016
        %v1280 = vadd.f32 %v1279, 0.008332121
        %v1281 = vmul.f32 %v1278, %v1280
        %v1282 = vadd.f32 %v1281, -0.16666654
        %v1283 = vmul.f32 %v1278, %v1282
        %v1284 = vadd.f32 %v1283, 1.0
        %v1285 = vmul.f32 %v1284, %v1269
        %vm1286 = vweird.f32 %v668
        %v1287 = vadd.s32 %v1270, 3
        %v1288 = vand.u32 %v1287, 3
        %vm1289 = vcmp.lt.s32.totalorder %v1288, 2
        %vm1290 = vcmp.eq.s32.totalorder %v1288, 0
        %v1291 = vxor.u32 %v1285, 2147483648
        %v1292 = vsel %vm1290, %v1277, %v1291
        %vm1293 = vcmp.eq.s32.totalorder %v1288, 2
        %v1294 = vxor.u32 %v1277, 2147483648
        %v1295 = vsel %vm1293, %v1294, %v1285
        %v1296 = vsel %vm1289, %v1292, %v1295
        %v1297 = vsel %vm1286, nan, %v1296
        %v1298 = vand.u32 2147483647, %v433
        %vm1299 = vcmp.le.f32.partialorder %v1298, 0.7853982
        %vm1300 = vcmp.lt.s32.totalorder %v433, 0
        %v1301 = vand.u32 %v433, 2139095040
        %v1302 = vshrl.u32 %v1301, 23
        %v1303 = vsub.s32 %v1302, 127
        %v1304 = vand.u32 2147483647, %v433
        %v1305 = vand.u32 %v1304, 8388607
        %v1306 = vor.u32 %v1305, 8388608
        %v1307 = vsub.s32 0, %v1306
        %v1308 = vadd.s32 %v1303, 1
        %vm1309 = vcmp.gt.s32.totalorder %v1308, 0
        %v1310 = vsel %vm1309, %v1308, 0
        %v1311 = vshrl.u32 %v1310, 5
        %v1312 = vand.u32 %v1310, 31
        %v1313 = vsub.s32 32, %v1312
        %v1314 = vshrl.u32 683565275, %v1313
        %v1315 = vshll.u32 683565275, %v1312
        %v1316 = vshrl.u32 2475754826, %v1313
        %v1317 = vor.u32 %v1315, %v1316
        %v1318 = vshll.u32 2475754826, %v1312
        %v1319 = vshrl.u32 2131351028, %v1313
        %v1320 = vor.u32 %v1318, %v1319
        %v1321 = vshll.u32 2131351028, %v1312
        %v1322 = vshrl.u32 2102212464, %v1313
        %v1323 = vor.u32 %v1321, %v1322
        %v1324 = vshll.u32 2102212464, %v1312
        %v1325 = vshrl.u32 920167782, %v1313
        %v1326 = vor.u32 %v1324, %v1325
        %v1327 = vshll.u32 920167782, %v1312
        %v1328 = vshrl.u32 1326507024, %v1313
        %v1329 = vor.u32 %v1327, %v1328
        %vm1330 = vcmp.lt.s32.totalorder %v1311, 1
        %vm1331 = vcmp.lt.s32.totalorder %v1311, 2
        %vm1332 = vcmp.lt.s32.totalorder %v1311, 3
        %vm1333 = vcmp.lt.s32.totalorder %v1311, 4
        %v1334 = vsel %vm1330, %v1314, %v1317
        %v1335 = vsel %vm1333, %v1323, 2102212464
        %v1336 = vsel %vm1332, %v1320, %v1335
        %v1337 = vsel %vm1331, %v1334, %v1336
        %v1338 = vsel %vm1330, %v1317, %v1320
        %v1339 = vsel %vm1333, %v1326, 920167782
        %v1340 = vsel %vm1332, %v1323, %v1339
        %v1341 = vsel %vm1331, %v1338, %v1340
        %v1342 = vsel %vm1330, %v1320, %v1323
        %v1343 = vsel %vm1333, %v1329, 1326507024
        %v1344 = vsel %vm1332, %v1326, %v1343
        %v1345 = vsel %vm1331, %v1342, %v1344
        %v1346 = vshll.u32 %v1306, 8
        %v1347 = vand.u32 %v1346, 65535
        %v1348 = vshrl.u32 %v1346, 16
        %v1349 = vand.u32 %v1345, 65535
        %v1350 = vshrl.u32 %v1345, 16
        %v1351 = vmul.u32 %v1347, %v1349
        %v1352 = vmul.u32 %v1347, %v1350
        %v1353 = vmul.u32 %v1348, %v1349
        %v1354 = vmul.u32 %v1348, %v1350
        %v1355 = vshll.u32 %v1352, 16
        %v1356 = vshrl.u32 %v1352, 16
        %v1357 = vshll.u32 %v1353, 16
        %v1358 = vshrl.u32 %v1353, 16
        %vm1359 = vc.u32 %v1351, %v1355
        %v1360 = vsel %vm1359, 1, 0
        %v1361 = vadd.s32 %v1351, %v1355
        %v1362 = vadd.s32 %v1354, %v1360
        %vm1363 = vc.u32 %v1361, %v1357
        %v1364 = vsel %vm1363, 1, 0
        %v1365 = vadd.s32 %v1361, %v1357
        %v1366 = vadd.s32 %v1362, %v1364
        %v1367 = vadd.s32 %v1366, %v1356
        %v1368 = vadd.s32 %v1367, %v1358
        %v1369 = vand.u32 %v1346, 65535
        %v1370 = vshrl.u32 %v1346, 16
        %v1371 = vand.u32 %v1341, 65535
        %v1372 = vshrl.u32 %v1341, 16
        %v1373 = vmul.u32 %v1369, %v1371
        %v1374 = vmul.u32 %v1369, %v1372
        %v1375 = vmul.u32 %v1370, %v1371
        %v1376 = vmul.u32 %v1370, %v1372
        %v1377 = vshll.u32 %v1374, 16
        %v1378 = vshrl.u32 %v1374, 16
        %v1379 = vshll.u32 %v1375, 16
        %v1380 = vshrl.u32 %v1375, 16
        %vm1381 = vc.u32 %v1373, %v1377
        %v1382 = vsel %vm1381, 1, 0
        %v1383 = vadd.s32 %v1373, %v1377
        %v1384 = vadd.s32 %v1376, %v1382
        %vm1385 = vc.u32 %v1383, %v1379
        %v1386 = vsel %vm1385, 1, 0
        %v1387 = vadd.s32 %v1383, %v1379
        %v1388 = vadd.s32 %v1384, %v1386
        %v1389 = vadd.s32 %v1388, %v1378
        %v1390 = vadd.s32 %v1389, %v1380
        %v1391 = vmul.u32 %v1346, %v1337
        %v1392 = vadd.s32 %v1368, %v1387
        %vm1393 = vc.u32 %v1368, %v1387
        %v1394 = vadd.s32 %v1390, 1
        %v1395 = vsel %vm1393, %v1394, %v1390
        %v1396 = vadd.s32 %v1391, %v1395
        %v1397 = vadd.s32 %v1396, 536870912
        %v1398 = vshrl.u32 %v1397, 30
        %v1399 = vshll.u32 %v1398, 30
        %v1400 = vsub.s32 %v1396, %v1399
        %vm1401 = vcmp.lt.s32.totalorder %v1400, 0
        %v1402 = vsub.s32 0, %v1400
        %v1403 = vsel %vm1401, %v1402, %v1400
        %v1404 = vclz %v1403
        %v1405 = vsub.s32 %v1404, 2
        %vm1406 = vcmp.gt.s32.totalorder 0, %v1405
        %v1407 = vsel %vm1406, 0, %v1405
        %v1408 = vsub.s32 32, %v1407
        %v1409 = vshll.u32 %v1400, %v1407
        %v1410 = vshrl.u32 %v1392, %v1408
        %v1411 = vor.u32 %v1409, %v1410
        %v1412 = vsub.s32 4294967266, %v1407
        %v1413 = vadd.s32 %v1412, 127
        %v1414 = vshll.u32 %v1413, 23
        %v1415 = vor.u32 4788187, %v1414
        %v1416 = vand.u32 2147483647, %v1415
        %v1418 = vcvt.s32.f32 %v1411
        %v1419 = vmul.f32 %v1418, %v1416
        %v1420 = vxor.u32 %v1419, 2147483648
        %v1421 = vsel %vm1300, %v1420, %v1419
        %v1422 = vsub.s32 4, %v1398
        %v1423 = vsel %vm1300, %v1422, %v1398
        %v1424 = vsel %vm1299, %v433, %v1421
        %v1425 = vsel %vm1299, 0, %v1423
        %v1426 = vmul.f32 %v1424, %v1424
        %v1427 = vmul.f32 %v1426, -0.001358992
        %v1428 = vadd.f32 %v1427, 0.041655596
        %v1429 = vmul.f32 %v1426, %v1428
        %v1430 = vadd.f32 %v1429, -0.4999988
        %v1431 = vmul.f32 %v1426, %v1430
        %v1432 = vadd.f32 1.0, %v1431
        %v1433 = vmul.f32 %v1424, %v1424
        %v1434 = vmul.f32 %v1433, -0.00019511016
        %v1435 = vadd.f32 %v1434, 0.008332121
        %v1436 = vmul.f32 %v1433, %v1435
        %v1437 = vadd.f32 %v1436, -0.16666654
        %v1438 = vmul.f32 %v1433, %v1437
        %v1439 = vadd.f32 %v1438, 1.0
        %v1440 = vmul.f32 %v1439, %v1424
        %vm1441 = vweird.f32 %v433
        %v1442 = vadd.s32 %v1425, 3
        %v1443 = vand.u32 %v1442, 3
        %vm1444 = vcmp.lt.s32.totalorder %v1443, 2
        %vm1445 = vcmp.eq.s32.totalorder %v1443, 0
        %v1446 = vxor.u32 %v1440, 2147483648
        %v1447 = vsel %vm1445, %v1432, %v1446
        %vm1448 = vcmp.eq.s32.totalorder %v1443, 2
        %v1449 = vxor.u32 %v1432, 2147483648
        %v1450 = vsel %vm1448, %v1449, %v1440
        %v1451 = vsel %vm1444, %v1447, %v1450
        %v1452 = vsel %vm1441, nan, %v1451
        %v1453 = vand.u32 2147483647, %v672
        %vm1454 = vcmp.le.f32.partialorder %v1453, 0.7853982
        %vm1455 = vcmp.lt.s32.totalorder %v672, 0
        %v1456 = vand.u32 %v672, 2139095040
        %v1457 = vshrl.u32 %v1456, 23
        %v1458 = vsub.s32 %v1457, 127
        %v1459 = vand.u32 2147483647, %v672
        %v1460 = vand.u32 %v1459, 8388607
        %v1461 = vor.u32 %v1460, 8388608
        %v1462 = vsub.s32 0, %v1461
        %v1463 = vadd.s32 %v1458, 1
        %vm1464 = vcmp.gt.s32.totalorder %v1463, 0
        %v1465 = vsel %vm1464, %v1463, 0
        %v1466 = vshrl.u32 %v1465, 5
        %v1467 = vand.u32 %v1465, 31
        %v1468 = vsub.s32 32, %v1467
        %v1469 = vshrl.u32 683565275, %v1468
        %v1470 = vshll.u32 683565275, %v1467
        %v1471 = vshrl.u32 2475754826, %v1468
        %v1472 = vor.u32 %v1470, %v1471
        %v1473 = vshll.u32 2475754826, %v1467
        %v1474 = vshrl.u32 2131351028, %v1468
        %v1475 = vor.u32 %v1473, %v1474
        %v1476 = vshll.u32 2131351028, %v1467
        %v1477 = vshrl.u32 2102212464, %v1468
        %v1478 = vor.u32 %v1476, %v1477
        %v1479 = vshll.u32 2102212464, %v1467
        %v1480 = vshrl.u32 920167782, %v1468
        %v1481 = vor.u32 %v1479, %v1480
        %v1482 = vshll.u32 920167782, %v1467
        %v1483 = vshrl.u32 1326507024, %v1468
        %v1484 = vor.u32 %v1482, %v1483
        %vm1485 = vcmp.lt.s32.totalorder %v1466, 1
        %vm1486 = vcmp.lt.s32.totalorder %v1466, 2
        %vm1487 = vcmp.lt.s32.totalorder %v1466, 3
        %vm1488 = vcmp.lt.s32.totalorder %v1466, 4
        %v1489 = vsel %vm1485, %v1469, %v1472
        %v1490 = vsel %vm1488, %v1478, 2102212464
        %v1491 = vsel %vm1487, %v1475, %v1490
        %v1492 = vsel %vm1486, %v1489, %v1491
        %v1493 = vsel %vm1485, %v1472, %v1475
        %v1494 = vsel %vm1488, %v1481, 920167782
        %v1495 = vsel %vm1487, %v1478, %v1494
        %v1496 = vsel %vm1486, %v1493, %v1495
        %v1497 = vsel %vm1485, %v1475, %v1478
        %v1498 = vsel %vm1488, %v1484, 1326507024
        %v1499 = vsel %vm1487, %v1481, %v1498
        %v1500 = vsel %vm1486, %v1497, %v1499
        %v1501 = vshll.u32 %v1461, 8
        %v1502 = vand.u32 %v1501, 65535
        %v1503 = vshrl.u32 %v1501, 16
        %v1504 = vand.u32 %v1500, 65535
        %v1505 = vshrl.u32 %v1500, 16
        %v1506 = vmul.u32 %v1502, %v1504
        %v1507 = vmul.u32 %v1502, %v1505
        %v1508 = vmul.u32 %v1503, %v1504
        %v1509 = vmul.u32 %v1503, %v1505
        %v1510 = vshll.u32 %v1507, 16
        %v1511 = vshrl.u32 %v1507, 16
        %v1512 = vshll.u32 %v1508, 16
        %v1513 = vshrl.u32 %v1508, 16
        %vm1514 = vc.u32 %v1506, %v1510
        %v1515 = vsel %vm1514, 1, 0
        %v1516 = vadd.s32 %v1506, %v1510
        %v1517 = vadd.s32 %v1509, %v1515
        %vm1518 = vc.u32 %v1516, %v1512
        %v1519 = vsel %vm1518, 1, 0
        %v1520 = vadd.s32 %v1516, %v1512
        %v1521 = vadd.s32 %v1517, %v1519
        %v1522 = vadd.s32 %v1521, %v1511
        %v1523 = vadd.s32 %v1522, %v1513
        %v1524 = vand.u32 %v1501, 65535
        %v1525 = vshrl.u32 %v1501, 16
        %v1526 = vand.u32 %v1496, 65535
        %v1527 = vshrl.u32 %v1496, 16
        %v1528 = vmul.u32 %v1524, %v1526
        %v1529 = vmul.u32 %v1524, %v1527
        %v1530 = vmul.u32 %v1525, %v1526
        %v1531 = vmul.u32 %v1525, %v1527
        %v1532 = vshll.u32 %v1529, 16
        %v1533 = vshrl.u32 %v1529, 16
        %v1534 = vshll.u32 %v1530, 16
        %v1535 = vshrl.u32 %v1530, 16
        %vm1536 = vc.u32 %v1528, %v1532
        %v1537 = vsel %vm1536, 1, 0
        %v1538 = vadd.s32 %v1528, %v1532
        %v1539 = vadd.s32 %v1531, %v1537
        %vm1540 = vc.u32 %v1538, %v1534
        %v1541 = vsel %vm1540, 1, 0
        %v1542 = vadd.s32 %v1538, %v1534
        %v1543 = vadd.s32 %v1539, %v1541
        %v1544 = vadd.s32 %v1543, %v1533
        %v1545 = vadd.s32 %v1544, %v1535
        %v1546 = vmul.u32 %v1501, %v1492
        %v1547 = vadd.s32 %v1523, %v1542
        %vm1548 = vc.u32 %v1523, %v1542
        %v1549 = vadd.s32 %v1545, 1
        %v1550 = vsel %vm1548, %v1549, %v1545
        %v1551 = vadd.s32 %v1546, %v1550
        %v1552 = vadd.s32 %v1551, 536870912
        %v1553 = vshrl.u32 %v1552, 30
        %v1554 = vshll.u32 %v1553, 30
        %v1555 = vsub.s32 %v1551, %v1554
        %vm1556 = vcmp.lt.s32.totalorder %v1555, 0
        %v1557 = vsub.s32 0, %v1555
        %v1558 = vsel %vm1556, %v1557, %v1555
        %v1559 = vclz %v1558
        %v1560 = vsub.s32 %v1559, 2
        %vm1561 = vcmp.gt.s32.totalorder 0, %v1560
        %v1562 = vsel %vm1561, 0, %v1560
        %v1563 = vsub.s32 32, %v1562
        %v1564 = vshll.u32 %v1555, %v1562
        %v1565 = vshrl.u32 %v1547, %v1563
        %v1566 = vor.u32 %v1564, %v1565
        %v1567 = vsub.s32 4294967266, %v1562
        %v1568 = vadd.s32 %v1567, 127
        %v1569 = vshll.u32 %v1568, 23
        %v1570 = vor.u32 4788187, %v1569
        %v1571 = vand.u32 2147483647, %v1570
        %v1573 = vcvt.s32.f32 %v1566
        %v1574 = vmul.f32 %v1573, %v1571
        %v1575 = vxor.u32 %v1574, 2147483648
        %v1576 = vsel %vm1455, %v1575, %v1574
        %v1577 = vsub.s32 4, %v1553
        %v1578 = vsel %vm1455, %v1577, %v1553
        %v1579 = vsel %vm1454, %v672, %v1576
        %v1580 = vsel %vm1454, 0, %v1578
        %v1581 = vmul.f32 %v1579, %v1579
        %v1582 = vmul.f32 %v1581, -0.001358992
        %v1583 = vadd.f32 %v1582, 0.041655596
        %v1584 = vmul.f32 %v1581, %v1583
        %v1585 = vadd.f32 %v1584, -0.4999988
        %v1586 = vmul.f32 %v1581, %v1585
        %v1587 = vadd.f32 1.0, %v1586
        %v1588 = vmul.f32 %v1579, %v1579
        %v1589 = vmul.f32 %v1588, -0.00019511016
        %v1590 = vadd.f32 %v1589, 0.008332121
        %v1591 = vmul.f32 %v1588, %v1590
        %v1592 = vadd.f32 %v1591, -0.16666654
        %v1593 = vmul.f32 %v1588, %v1592
        %v1594 = vadd.f32 %v1593, 1.0
        %v1595 = vmul.f32 %v1594, %v1579
        %vm1596 = vweird.f32 %v672
        %v1597 = vadd.s32 %v1580, 3
        %v1598 = vand.u32 %v1597, 3
        %vm1599 = vcmp.lt.s32.totalorder %v1598, 2
        %vm1600 = vcmp.eq.s32.totalorder %v1598, 0
        %v1601 = vxor.u32 %v1595, 2147483648
        %v1602 = vsel %vm1600, %v1587, %v1601
        %vm1603 = vcmp.eq.s32.totalorder %v1598, 2
        %v1604 = vxor.u32 %v1587, 2147483648
        %v1605 = vsel %vm1603, %v1604, %v1595
        %v1606 = vsel %vm1599, %v1602, %v1605
        %v1607 = vsel %vm1596, nan, %v1606
        %v1608 = vand.u32 2147483647, %v437
        %vm1609 = vcmp.le.f32.partialorder %v1608, 0.7853982
        %vm1610 = vcmp.lt.s32.totalorder %v437, 0
        %v1611 = vand.u32 %v437, 2139095040
        %v1612 = vshrl.u32 %v1611, 23
        %v1613 = vsub.s32 %v1612, 127
        %v1614 = vand.u32 2147483647, %v437
        %v1615 = vand.u32 %v1614, 8388607
        %v1616 = vor.u32 %v1615, 8388608
        %v1617 = vsub.s32 0, %v1616
        %v1618 = vadd.s32 %v1613, 1
        %vm1619 = vcmp.gt.s32.totalorder %v1618, 0
        %v1620 = vsel %vm1619, %v1618, 0
        %v1621 = vshrl.u32 %v1620, 5
        %v1622 = vand.u32 %v1620, 31
        %v1623 = vsub.s32 32, %v1622
        %v1624 = vshrl.u32 683565275, %v1623
        %v1625 = vshll.u32 683565275, %v1622
        %v1626 = vshrl.u32 2475754826, %v1623
        %v1627 = vor.u32 %v1625, %v1626
        %v1628 = vshll.u32 2475754826, %v1622
        %v1629 = vshrl.u32 2131351028, %v1623
        %v1630 = vor.u32 %v1628, %v1629
        %v1631 = vshll.u32 2131351028, %v1622
        %v1632 = vshrl.u32 2102212464, %v1623
        %v1633 = vor.u32 %v1631, %v1632
        %v1634 = vshll.u32 2102212464, %v1622
        %v1635 = vshrl.u32 920167782, %v1623
        %v1636 = vor.u32 %v1634, %v1635
        %v1637 = vshll.u32 920167782, %v1622
        %v1638 = vshrl.u32 1326507024, %v1623
        %v1639 = vor.u32 %v1637, %v1638
        %vm1640 = vcmp.lt.s32.totalorder %v1621, 1
        %vm1641 = vcmp.lt.s32.totalorder %v1621, 2
        %vm1642 = vcmp.lt.s32.totalorder %v1621, 3
        %vm1643 = vcmp.lt.s32.totalorder %v1621, 4
        %v1644 = vsel %vm1640, %v1624, %v1627
        %v1645 = vsel %vm1643, %v1633, 2102212464
        %v1646 = vsel %vm1642, %v1630, %v1645
        %v1647 = vsel %vm1641, %v1644, %v1646
        %v1648 = vsel %vm1640, %v1627, %v1630
        %v1649 = vsel %vm1643, %v1636, 920167782
        %v1650 = vsel %vm1642, %v1633, %v1649
        %v1651 = vsel %vm1641, %v1648, %v1650
        %v1652 = vsel %vm1640, %v1630, %v1633
        %v1653 = vsel %vm1643, %v1639, 1326507024
        %v1654 = vsel %vm1642, %v1636, %v1653
        %v1655 = vsel %vm1641, %v1652, %v1654
        %v1656 = vshll.u32 %v1616, 8
        %v1657 = vand.u32 %v1656, 65535
        %v1658 = vshrl.u32 %v1656, 16
        %v1659 = vand.u32 %v1655, 65535
        %v1660 = vshrl.u32 %v1655, 16
        %v1661 = vmul.u32 %v1657, %v1659
        %v1662 = vmul.u32 %v1657, %v1660
        %v1663 = vmul.u32 %v1658, %v1659
        %v1664 = vmul.u32 %v1658, %v1660
        %v1665 = vshll.u32 %v1662, 16
        %v1666 = vshrl.u32 %v1662, 16
        %v1667 = vshll.u32 %v1663, 16
        %v1668 = vshrl.u32 %v1663, 16
        %vm1669 = vc.u32 %v1661, %v1665
        %v1670 = vsel %vm1669, 1, 0
        %v1671 = vadd.s32 %v1661, %v1665
        %v1672 = vadd.s32 %v1664, %v1670
        %vm1673 = vc.u32 %v1671, %v1667
        %v1674 = vsel %vm1673, 1, 0
        %v1675 = vadd.s32 %v1671, %v1667
        %v1676 = vadd.s32 %v1672, %v1674
        %v1677 = vadd.s32 %v1676, %v1666
        %v1678 = vadd.s32 %v1677, %v1668
        %v1679 = vand.u32 %v1656, 65535
        %v1680 = vshrl.u32 %v1656, 16
        %v1681 = vand.u32 %v1651, 65535
        %v1682 = vshrl.u32 %v1651, 16
        %v1683 = vmul.u32 %v1679, %v1681
        %v1684 = vmul.u32 %v1679, %v1682
        %v1685 = vmul.u32 %v1680, %v1681
        %v1686 = vmul.u32 %v1680, %v1682
        %v1687 = vshll.u32 %v1684, 16
        %v1688 = vshrl.u32 %v1684, 16
        %v1689 = vshll.u32 %v1685, 16
        %v1690 = vshrl.u32 %v1685, 16
        %vm1691 = vc.u32 %v1683, %v1687
        %v1692 = vsel %vm1691, 1, 0
        %v1693 = vadd.s32 %v1683, %v1687
        %v1694 = vadd.s32 %v1686, %v1692
        %vm1695 = vc.u32 %v1693, %v1689
        %v1696 = vsel %vm1695, 1, 0
        %v1697 = vadd.s32 %v1693, %v1689
        %v1698 = vadd.s32 %v1694, %v1696
        %v1699 = vadd.s32 %v1698, %v1688
        %v1700 = vadd.s32 %v1699, %v1690
        %v1701 = vmul.u32 %v1656, %v1647
        %v1702 = vadd.s32 %v1678, %v1697
        %vm1703 = vc.u32 %v1678, %v1697
        %v1704 = vadd.s32 %v1700, 1
        %v1705 = vsel %vm1703, %v1704, %v1700
        %v1706 = vadd.s32 %v1701, %v1705
        %v1707 = vadd.s32 %v1706, 536870912
        %v1708 = vshrl.u32 %v1707, 30
        %v1709 = vshll.u32 %v1708, 30
        %v1710 = vsub.s32 %v1706, %v1709
        %vm1711 = vcmp.lt.s32.totalorder %v1710, 0
        %v1712 = vsub.s32 0, %v1710
        %v1713 = vsel %vm1711, %v1712, %v1710
        %v1714 = vclz %v1713
        %v1715 = vsub.s32 %v1714, 2
        %vm1716 = vcmp.gt.s32.totalorder 0, %v1715
        %v1717 = vsel %vm1716, 0, %v1715
        %v1718 = vsub.s32 32, %v1717
        %v1719 = vshll.u32 %v1710, %v1717
        %v1720 = vshrl.u32 %v1702, %v1718
        %v1721 = vor.u32 %v1719, %v1720
        %v1722 = vsub.s32 4294967266, %v1717
        %v1723 = vadd.s32 %v1722, 127
        %v1724 = vshll.u32 %v1723, 23
        %v1725 = vor.u32 4788187, %v1724
        %v1726 = vand.u32 2147483647, %v1725
        %v1728 = vcvt.s32.f32 %v1721
        %v1729 = vmul.f32 %v1728, %v1726
        %v1730 = vxor.u32 %v1729, 2147483648
        %v1731 = vsel %vm1610, %v1730, %v1729
        %v1732 = vsub.s32 4, %v1708
        %v1733 = vsel %vm1610, %v1732, %v1708
        %v1734 = vsel %vm1609, %v437, %v1731
        %v1735 = vsel %vm1609, 0, %v1733
        %v1736 = vmul.f32 %v1734, %v1734
        %v1737 = vmul.f32 %v1736, -0.001358992
        %v1738 = vadd.f32 %v1737, 0.041655596
        %v1739 = vmul.f32 %v1736, %v1738
        %v1740 = vadd.f32 %v1739, -0.4999988
        %v1741 = vmul.f32 %v1736, %v1740
        %v1742 = vadd.f32 1.0, %v1741
        %v1743 = vmul.f32 %v1734, %v1734
        %v1744 = vmul.f32 %v1743, -0.00019511016
        %v1745 = vadd.f32 %v1744, 0.008332121
        %v1746 = vmul.f32 %v1743, %v1745
        %v1747 = vadd.f32 %v1746, -0.16666654
        %v1748 = vmul.f32 %v1743, %v1747
        %v1749 = vadd.f32 %v1748, 1.0
        %v1750 = vmul.f32 %v1749, %v1734
        %vm1751 = vweird.f32 %v437
        %v1752 = vadd.s32 %v1735, 3
        %v1753 = vand.u32 %v1752, 3
        %vm1754 = vcmp.lt.s32.totalorder %v1753, 2
        %vm1755 = vcmp.eq.s32.totalorder %v1753, 0
        %v1756 = vxor.u32 %v1750, 2147483648
        %v1757 = vsel %vm1755, %v1742, %v1756
        %vm1758 = vcmp.eq.s32.totalorder %v1753, 2
        %v1759 = vxor.u32 %v1742, 2147483648
        %v1760 = vsel %vm1758, %v1759, %v1750
        %v1761 = vsel %vm1754, %v1757, %v1760
        %v1762 = vsel %vm1751, nan, %v1761
        %v1763 = vand.u32 2147483647, %v676
        %vm1764 = vcmp.le.f32.partialorder %v1763, 0.7853982
        %vm1765 = vcmp.lt.s32.totalorder %v676, 0
        %v1766 = vand.u32 %v676, 2139095040
        %v1767 = vshrl.u32 %v1766, 23
        %v1768 = vsub.s32 %v1767, 127
        %v1769 = vand.u32 2147483647, %v676
        %v1770 = vand.u32 %v1769, 8388607
        %v1771 = vor.u32 %v1770, 8388608
        %v1772 = vsub.s32 0, %v1771
        %v1773 = vadd.s32 %v1768, 1
        %vm1774 = vcmp.gt.s32.totalorder %v1773, 0
        %v1775 = vsel %vm1774, %v1773, 0
        %v1776 = vshrl.u32 %v1775, 5
        %v1777 = vand.u32 %v1775, 31
        %v1778 = vsub.s32 32, %v1777
        %v1779 = vshrl.u32 683565275, %v1778
        %v1780 = vshll.u32 683565275, %v1777
        %v1781 = vshrl.u32 2475754826, %v1778
        %v1782 = vor.u32 %v1780, %v1781
        %v1783 = vshll.u32 2475754826, %v1777
        %v1784 = vshrl.u32 2131351028, %v1778
        %v1785 = vor.u32 %v1783, %v1784
        %v1786 = vshll.u32 2131351028, %v1777
        %v1787 = vshrl.u32 2102212464, %v1778
        %v1788 = vor.u32 %v1786, %v1787
        %v1789 = vshll.u32 2102212464, %v1777
        %v1790 = vshrl.u32 920167782, %v1778
        %v1791 = vor.u32 %v1789, %v1790
        %v1792 = vshll.u32 920167782, %v1777
        %v1793 = vshrl.u32 1326507024, %v1778
        %v1794 = vor.u32 %v1792, %v1793
        %vm1795 = vcmp.lt.s32.totalorder %v1776, 1
        %vm1796 = vcmp.lt.s32.totalorder %v1776, 2
        %vm1797 = vcmp.lt.s32.totalorder %v1776, 3
        %vm1798 = vcmp.lt.s32.totalorder %v1776, 4
        %v1799 = vsel %vm1795, %v1779, %v1782
        %v1800 = vsel %vm1798, %v1788, 2102212464
        %v1801 = vsel %vm1797, %v1785, %v1800
        %v1802 = vsel %vm1796, %v1799, %v1801
        %v1803 = vsel %vm1795, %v1782, %v1785
        %v1804 = vsel %vm1798, %v1791, 920167782
        %v1805 = vsel %vm1797, %v1788, %v1804
        %v1806 = vsel %vm1796, %v1803, %v1805
        %v1807 = vsel %vm1795, %v1785, %v1788
        %v1808 = vsel %vm1798, %v1794, 1326507024
        %v1809 = vsel %vm1797, %v1791, %v1808
        %v1810 = vsel %vm1796, %v1807, %v1809
        %v1811 = vshll.u32 %v1771, 8
        %v1812 = vand.u32 %v1811, 65535
        %v1813 = vshrl.u32 %v1811, 16
        %v1814 = vand.u32 %v1810, 65535
        %v1815 = vshrl.u32 %v1810, 16
        %v1816 = vmul.u32 %v1812, %v1814
        %v1817 = vmul.u32 %v1812, %v1815
        %v1818 = vmul.u32 %v1813, %v1814
        %v1819 = vmul.u32 %v1813, %v1815
        %v1820 = vshll.u32 %v1817, 16
        %v1821 = vshrl.u32 %v1817, 16
        %v1822 = vshll.u32 %v1818, 16
        %v1823 = vshrl.u32 %v1818, 16
        %vm1824 = vc.u32 %v1816, %v1820
        %v1825 = vsel %vm1824, 1, 0
        %v1826 = vadd.s32 %v1816, %v1820
        %v1827 = vadd.s32 %v1819, %v1825
        %vm1828 = vc.u32 %v1826, %v1822
        %v1829 = vsel %vm1828, 1, 0
        %v1830 = vadd.s32 %v1826, %v1822
        %v1831 = vadd.s32 %v1827, %v1829
        %v1832 = vadd.s32 %v1831, %v1821
        %v1833 = vadd.s32 %v1832, %v1823
        %v1834 = vand.u32 %v1811, 65535
        %v1835 = vshrl.u32 %v1811, 16
        %v1836 = vand.u32 %v1806, 65535
        %v1837 = vshrl.u32 %v1806, 16
        %v1838 = vmul.u32 %v1834, %v1836
        %v1839 = vmul.u32 %v1834, %v1837
        %v1840 = vmul.u32 %v1835, %v1836
        %v1841 = vmul.u32 %v1835, %v1837
        %v1842 = vshll.u32 %v1839, 16
        %v1843 = vshrl.u32 %v1839, 16
        %v1844 = vshll.u32 %v1840, 16
        %v1845 = vshrl.u32 %v1840, 16
        %vm1846 = vc.u32 %v1838, %v1842
        %v1847 = vsel %vm1846, 1, 0
        %v1848 = vadd.s32 %v1838, %v1842
        %v1849 = vadd.s32 %v1841, %v1847
        %vm1850 = vc.u32 %v1848, %v1844
        %v1851 = vsel %vm1850, 1, 0
        %v1852 = vadd.s32 %v1848, %v1844
        %v1853 = vadd.s32 %v1849, %v1851
        %v1854 = vadd.s32 %v1853, %v1843
        %v1855 = vadd.s32 %v1854, %v1845
        %v1856 = vmul.u32 %v1811, %v1802
        %v1857 = vadd.s32 %v1833, %v1852
        %vm1858 = vc.u32 %v1833, %v1852
        %v1859 = vadd.s32 %v1855, 1
        %v1860 = vsel %vm1858, %v1859, %v1855
        %v1861 = vadd.s32 %v1856, %v1860
        %v1862 = vadd.s32 %v1861, 536870912
        %v1863 = vshrl.u32 %v1862, 30
        %v1864 = vshll.u32 %v1863, 30
        %v1865 = vsub.s32 %v1861, %v1864
        %vm1866 = vcmp.lt.s32.totalorder %v1865, 0
        %v1867 = vsub.s32 0, %v1865
        %v1868 = vsel %vm1866, %v1867, %v1865
        %v1869 = vclz %v1868
        %v1870 = vsub.s32 %v1869, 2
        %vm1871 = vcmp.gt.s32.totalorder 0, %v1870
        %v1872 = vsel %vm1871, 0, %v1870
        %v1873 = vsub.s32 32, %v1872
        %v1874 = vshll.u32 %v1865, %v1872
        %v1875 = vshrl.u32 %v1857, %v1873
        %v1876 = vor.u32 %v1874, %v1875
        %v1877 = vsub.s32 4294967266, %v1872
        %v1878 = vadd.s32 %v1877, 127
        %v1879 = vshll.u32 %v1878, 23
        %v1880 = vor.u32 4788187, %v1879
        %v1881 = vand.u32 2147483647, %v1880
        %v1883 = vcvt.s32.f32 %v1876
        %v1884 = vmul.f32 %v1883, %v1881
        %v1885 = vxor.u32 %v1884, 2147483648
        %v1886 = vsel %vm1765, %v1885, %v1884
        %v1887 = vsub.s32 4, %v1863
        %v1888 = vsel %vm1765, %v1887, %v1863
        %v1889 = vsel %vm1764, %v676, %v1886
        %v1890 = vsel %vm1764, 0, %v1888
        %v1891 = vmul.f32 %v1889, %v1889
        %v1892 = vmul.f32 %v1891, -0.001358992
        %v1893 = vadd.f32 %v1892, 0.041655596
        %v1894 = vmul.f32 %v1891, %v1893
        %v1895 = vadd.f32 %v1894, -0.4999988
        %v1896 = vmul.f32 %v1891, %v1895
        %v1897 = vadd.f32 1.0, %v1896
        %v1898 = vmul.f32 %v1889, %v1889
        %v1899 = vmul.f32 %v1898, -0.00019511016
        %v1900 = vadd.f32 %v1899, 0.008332121
        %v1901 = vmul.f32 %v1898, %v1900
        %v1902 = vadd.f32 %v1901, -0.16666654
        %v1903 = vmul.f32 %v1898, %v1902
        %v1904 = vadd.f32 %v1903, 1.0
        %v1905 = vmul.f32 %v1904, %v1889
        %vm1906 = vweird.f32 %v676
        %v1907 = vadd.s32 %v1890, 3
        %v1908 = vand.u32 %v1907, 3
        %vm1909 = vcmp.lt.s32.totalorder %v1908, 2
        %vm1910 = vcmp.eq.s32.totalorder %v1908, 0
        %v1911 = vxor.u32 %v1905, 2147483648
        %v1912 = vsel %vm1910, %v1897, %v1911
        %vm1913 = vcmp.eq.s32.totalorder %v1908, 2
        %v1914 = vxor.u32 %v1897, 2147483648
        %v1915 = vsel %vm1913, %v1914, %v1905
        %v1916 = vsel %vm1909, %v1912, %v1915
        %v1917 = vsel %vm1906, nan, %v1916
        %1918 = vst [vmem:[%s161] sm:$0xff] %v832
        %1919 = vst [vmem:[%s161 + $0x8] sm:$0xff] %v987
        %1920 = vst [vmem:[%s161 + $0x10] sm:$0xff] %v1142
        %1921 = vst [vmem:[%s161 + $0x18] sm:$0xff] %v1297
        %1922 = vst [vmem:[%s161 + $0x20] sm:$0xff] %v1452
        %1923 = vst [vmem:[%s161 + $0x28] sm:$0xff] %v1607
        %1924 = vst [vmem:[%s161 + $0x30] sm:$0xff] %v1762
        %1925 = vst [vmem:[%s161 + $0x38] sm:$0xff] %v1917
        %v1926 = vand.u32 2147483647, %v425
        %vm1927 = vcmp.le.f32.partialorder %v1926, 0.7853982
        %vm1928 = vcmp.lt.s32.totalorder %v425, 0
        %v1929 = vand.u32 %v425, 2139095040
        %v1930 = vshrl.u32 %v1929, 23
        %v1931 = vsub.s32 %v1930, 127
        %v1932 = vand.u32 2147483647, %v425
        %v1933 = vand.u32 %v1932, 8388607
        %v1934 = vor.u32 %v1933, 8388608
        %v1935 = vsub.s32 0, %v1934
        %v1936 = vadd.s32 %v1931, 1
        %vm1937 = vcmp.gt.s32.totalorder %v1936, 0
        %v1938 = vsel %vm1937, %v1936, 0
        %v1939 = vshrl.u32 %v1938, 5
        %v1940 = vand.u32 %v1938, 31
        %v1941 = vsub.s32 32, %v1940
        %v1942 = vshrl.u32 683565275, %v1941
        %v1943 = vshll.u32 683565275, %v1940
        %v1944 = vshrl.u32 2475754826, %v1941
        %v1945 = vor.u32 %v1943, %v1944
        %v1946 = vshll.u32 2475754826, %v1940
        %v1947 = vshrl.u32 2131351028, %v1941
        %v1948 = vor.u32 %v1946, %v1947
        %v1949 = vshll.u32 2131351028, %v1940
        %v1950 = vshrl.u32 2102212464, %v1941
        %v1951 = vor.u32 %v1949, %v1950
        %v1952 = vshll.u32 2102212464, %v1940
        %v1953 = vshrl.u32 920167782, %v1941
        %v1954 = vor.u32 %v1952, %v1953
        %v1955 = vshll.u32 920167782, %v1940
        %v1956 = vshrl.u32 1326507024, %v1941
        %v1957 = vor.u32 %v1955, %v1956
        %vm1958 = vcmp.lt.s32.totalorder %v1939, 1
        %vm1959 = vcmp.lt.s32.totalorder %v1939, 2
        %vm1960 = vcmp.lt.s32.totalorder %v1939, 3
        %vm1961 = vcmp.lt.s32.totalorder %v1939, 4
        %v1962 = vsel %vm1958, %v1942, %v1945
        %v1963 = vsel %vm1961, %v1951, 2102212464
        %v1964 = vsel %vm1960, %v1948, %v1963
        %v1965 = vsel %vm1959, %v1962, %v1964
        %v1966 = vsel %vm1958, %v1945, %v1948
        %v1967 = vsel %vm1961, %v1954, 920167782
        %v1968 = vsel %vm1960, %v1951, %v1967
        %v1969 = vsel %vm1959, %v1966, %v1968
        %v1970 = vsel %vm1958, %v1948, %v1951
        %v1971 = vsel %vm1961, %v1957, 1326507024
        %v1972 = vsel %vm1960, %v1954, %v1971
        %v1973 = vsel %vm1959, %v1970, %v1972
        %v1974 = vshll.u32 %v1934, 8
        %v1975 = vand.u32 %v1974, 65535
        %v1976 = vshrl.u32 %v1974, 16
        %v1977 = vand.u32 %v1973, 65535
        %v1978 = vshrl.u32 %v1973, 16
        %v1979 = vmul.u32 %v1975, %v1977
        %v1980 = vmul.u32 %v1975, %v1978
        %v1981 = vmul.u32 %v1976, %v1977
        %v1982 = vmul.u32 %v1976, %v1978
        %v1983 = vshll.u32 %v1980, 16
        %v1984 = vshrl.u32 %v1980, 16
        %v1985 = vshll.u32 %v1981, 16
        %v1986 = vshrl.u32 %v1981, 16
        %vm1987 = vc.u32 %v1979, %v1983
        %v1988 = vsel %vm1987, 1, 0
        %v1989 = vadd.s32 %v1979, %v1983
        %v1990 = vadd.s32 %v1982, %v1988
        %vm1991 = vc.u32 %v1989, %v1985
        %v1992 = vsel %vm1991, 1, 0
        %v1993 = vadd.s32 %v1989, %v1985
        %v1994 = vadd.s32 %v1990, %v1992
        %v1995 = vadd.s32 %v1994, %v1984
        %v1996 = vadd.s32 %v1995, %v1986
        %v1997 = vand.u32 %v1974, 65535
        %v1998 = vshrl.u32 %v1974, 16
        %v1999 = vand.u32 %v1969, 65535
        %v2000 = vshrl.u32 %v1969, 16
        %v2001 = vmul.u32 %v1997, %v1999
        %v2002 = vmul.u32 %v1997, %v2000
        %v2003 = vmul.u32 %v1998, %v1999
        %v2004 = vmul.u32 %v1998, %v2000
        %v2005 = vshll.u32 %v2002, 16
        %v2006 = vshrl.u32 %v2002, 16
        %v2007 = vshll.u32 %v2003, 16
        %v2008 = vshrl.u32 %v2003, 16
        %vm2009 = vc.u32 %v2001, %v2005
        %v2010 = vsel %vm2009, 1, 0
        %v2011 = vadd.s32 %v2001, %v2005
        %v2012 = vadd.s32 %v2004, %v2010
        %vm2013 = vc.u32 %v2011, %v2007
        %v2014 = vsel %vm2013, 1, 0
        %v2015 = vadd.s32 %v2011, %v2007
        %v2016 = vadd.s32 %v2012, %v2014
        %v2017 = vadd.s32 %v2016, %v2006
        %v2018 = vadd.s32 %v2017, %v2008
        %v2019 = vmul.u32 %v1974, %v1965
        %v2020 = vadd.s32 %v1996, %v2015
        %vm2021 = vc.u32 %v1996, %v2015
        %v2022 = vadd.s32 %v2018, 1
        %v2023 = vsel %vm2021, %v2022, %v2018
        %v2024 = vadd.s32 %v2019, %v2023
        %v2025 = vadd.s32 %v2024, 536870912
        %v2026 = vshrl.u32 %v2025, 30
        %v2027 = vshll.u32 %v2026, 30
        %v2028 = vsub.s32 %v2024, %v2027
        %vm2029 = vcmp.lt.s32.totalorder %v2028, 0
        %v2030 = vsub.s32 0, %v2028
        %v2031 = vsel %vm2029, %v2030, %v2028
        %v2032 = vclz %v2031
        %v2033 = vsub.s32 %v2032, 2
        %vm2034 = vcmp.gt.s32.totalorder 0, %v2033
        %v2035 = vsel %vm2034, 0, %v2033
        %v2036 = vsub.s32 32, %v2035
        %v2037 = vshll.u32 %v2028, %v2035
        %v2038 = vshrl.u32 %v2020, %v2036
        %v2039 = vor.u32 %v2037, %v2038
        %v2040 = vsub.s32 4294967266, %v2035
        %v2041 = vadd.s32 %v2040, 127
        %v2042 = vshll.u32 %v2041, 23
        %v2043 = vor.u32 4788187, %v2042
        %v2044 = vand.u32 2147483647, %v2043
        %v2046 = vcvt.s32.f32 %v2039
        %v2047 = vmul.f32 %v2046, %v2044
        %v2048 = vxor.u32 %v2047, 2147483648
        %v2049 = vsel %vm1928, %v2048, %v2047
        %v2050 = vsub.s32 4, %v2026
        %v2051 = vsel %vm1928, %v2050, %v2026
        %v2052 = vsel %vm1927, %v425, %v2049
        %v2053 = vsel %vm1927, 0, %v2051
        %v2054 = vmul.f32 %v2052, %v2052
        %v2055 = vmul.f32 %v2054, -0.001358992
        %v2056 = vadd.f32 %v2055, 0.041655596
        %v2057 = vmul.f32 %v2054, %v2056
        %v2058 = vadd.f32 %v2057, -0.4999988
        %v2059 = vmul.f32 %v2054, %v2058
        %v2060 = vadd.f32 1.0, %v2059
        %v2061 = vmul.f32 %v2052, %v2052
        %v2062 = vmul.f32 %v2061, -0.00019511016
        %v2063 = vadd.f32 %v2062, 0.008332121
        %v2064 = vmul.f32 %v2061, %v2063
        %v2065 = vadd.f32 %v2064, -0.16666654
        %v2066 = vmul.f32 %v2061, %v2065
        %v2067 = vadd.f32 %v2066, 1.0
        %v2068 = vmul.f32 %v2067, %v2052
        %vm2069 = vweird.f32 %v425
        %v2070 = vand.u32 %v2053, 3
        %vm2071 = vcmp.lt.s32.totalorder %v2070, 2
        %vm2072 = vcmp.eq.s32.totalorder %v2070, 0
        %v2073 = vxor.u32 %v2068, 2147483648
        %v2074 = vsel %vm2072, %v2060, %v2073
        %vm2075 = vcmp.eq.s32.totalorder %v2070, 2
        %v2076 = vxor.u32 %v2060, 2147483648
        %v2077 = vsel %vm2075, %v2076, %v2068
        %v2078 = vsel %vm2071, %v2074, %v2077
        %v2079 = vsel %vm2069, nan, %v2078
        %v2080 = vand.u32 2147483647, %v664
        %vm2081 = vcmp.le.f32.partialorder %v2080, 0.7853982
        %vm2082 = vcmp.lt.s32.totalorder %v664, 0
        %v2083 = vand.u32 %v664, 2139095040
        %v2084 = vshrl.u32 %v2083, 23
        %v2085 = vsub.s32 %v2084, 127
        %v2086 = vand.u32 2147483647, %v664
        %v2087 = vand.u32 %v2086, 8388607
        %v2088 = vor.u32 %v2087, 8388608
        %v2089 = vsub.s32 0, %v2088
        %v2090 = vadd.s32 %v2085, 1
        %vm2091 = vcmp.gt.s32.totalorder %v2090, 0
        %v2092 = vsel %vm2091, %v2090, 0
        %v2093 = vshrl.u32 %v2092, 5
        %v2094 = vand.u32 %v2092, 31
        %v2095 = vsub.s32 32, %v2094
        %v2096 = vshrl.u32 683565275, %v2095
        %v2097 = vshll.u32 683565275, %v2094
        %v2098 = vshrl.u32 2475754826, %v2095
        %v2099 = vor.u32 %v2097, %v2098
        %v2100 = vshll.u32 2475754826, %v2094
        %v2101 = vshrl.u32 2131351028, %v2095
        %v2102 = vor.u32 %v2100, %v2101
        %v2103 = vshll.u32 2131351028, %v2094
        %v2104 = vshrl.u32 2102212464, %v2095
        %v2105 = vor.u32 %v2103, %v2104
        %v2106 = vshll.u32 2102212464, %v2094
        %v2107 = vshrl.u32 920167782, %v2095
        %v2108 = vor.u32 %v2106, %v2107
        %v2109 = vshll.u32 920167782, %v2094
        %v2110 = vshrl.u32 1326507024, %v2095
        %v2111 = vor.u32 %v2109, %v2110
        %vm2112 = vcmp.lt.s32.totalorder %v2093, 1
        %vm2113 = vcmp.lt.s32.totalorder %v2093, 2
        %vm2114 = vcmp.lt.s32.totalorder %v2093, 3
        %vm2115 = vcmp.lt.s32.totalorder %v2093, 4
        %v2116 = vsel %vm2112, %v2096, %v2099
        %v2117 = vsel %vm2115, %v2105, 2102212464
        %v2118 = vsel %vm2114, %v2102, %v2117
        %v2119 = vsel %vm2113, %v2116, %v2118
        %v2120 = vsel %vm2112, %v2099, %v2102
        %v2121 = vsel %vm2115, %v2108, 920167782
        %v2122 = vsel %vm2114, %v2105, %v2121
        %v2123 = vsel %vm2113, %v2120, %v2122
        %v2124 = vsel %vm2112, %v2102, %v2105
        %v2125 = vsel %vm2115, %v2111, 1326507024
        %v2126 = vsel %vm2114, %v2108, %v2125
        %v2127 = vsel %vm2113, %v2124, %v2126
        %v2128 = vshll.u32 %v2088, 8
        %v2129 = vand.u32 %v2128, 65535
        %v2130 = vshrl.u32 %v2128, 16
        %v2131 = vand.u32 %v2127, 65535
        %v2132 = vshrl.u32 %v2127, 16
        %v2133 = vmul.u32 %v2129, %v2131
        %v2134 = vmul.u32 %v2129, %v2132
        %v2135 = vmul.u32 %v2130, %v2131
        %v2136 = vmul.u32 %v2130, %v2132
        %v2137 = vshll.u32 %v2134, 16
        %v2138 = vshrl.u32 %v2134, 16
        %v2139 = vshll.u32 %v2135, 16
        %v2140 = vshrl.u32 %v2135, 16
        %vm2141 = vc.u32 %v2133, %v2137
        %v2142 = vsel %vm2141, 1, 0
        %v2143 = vadd.s32 %v2133, %v2137
        %v2144 = vadd.s32 %v2136, %v2142
        %vm2145 = vc.u32 %v2143, %v2139
        %v2146 = vsel %vm2145, 1, 0
        %v2147 = vadd.s32 %v2143, %v2139
        %v2148 = vadd.s32 %v2144, %v2146
        %v2149 = vadd.s32 %v2148, %v2138
        %v2150 = vadd.s32 %v2149, %v2140
        %v2151 = vand.u32 %v2128, 65535
        %v2152 = vshrl.u32 %v2128, 16
        %v2153 = vand.u32 %v2123, 65535
        %v2154 = vshrl.u32 %v2123, 16
        %v2155 = vmul.u32 %v2151, %v2153
        %v2156 = vmul.u32 %v2151, %v2154
        %v2157 = vmul.u32 %v2152, %v2153
        %v2158 = vmul.u32 %v2152, %v2154
        %v2159 = vshll.u32 %v2156, 16
        %v2160 = vshrl.u32 %v2156, 16
        %v2161 = vshll.u32 %v2157, 16
        %v2162 = vshrl.u32 %v2157, 16
        %vm2163 = vc.u32 %v2155, %v2159
        %v2164 = vsel %vm2163, 1, 0
        %v2165 = vadd.s32 %v2155, %v2159
        %v2166 = vadd.s32 %v2158, %v2164
        %vm2167 = vc.u32 %v2165, %v2161
        %v2168 = vsel %vm2167, 1, 0
        %v2169 = vadd.s32 %v2165, %v2161
        %v2170 = vadd.s32 %v2166, %v2168
        %v2171 = vadd.s32 %v2170, %v2160
        %v2172 = vadd.s32 %v2171, %v2162
        %v2173 = vmul.u32 %v2128, %v2119
        %v2174 = vadd.s32 %v2150, %v2169
        %vm2175 = vc.u32 %v2150, %v2169
        %v2176 = vadd.s32 %v2172, 1
        %v2177 = vsel %vm2175, %v2176, %v2172
        %v2178 = vadd.s32 %v2173, %v2177
        %v2179 = vadd.s32 %v2178, 536870912
        %v2180 = vshrl.u32 %v2179, 30
        %v2181 = vshll.u32 %v2180, 30
        %v2182 = vsub.s32 %v2178, %v2181
        %vm2183 = vcmp.lt.s32.totalorder %v2182, 0
        %v2184 = vsub.s32 0, %v2182
        %v2185 = vsel %vm2183, %v2184, %v2182
        %v2186 = vclz %v2185
        %v2187 = vsub.s32 %v2186, 2
        %vm2188 = vcmp.gt.s32.totalorder 0, %v2187
        %v2189 = vsel %vm2188, 0, %v2187
        %v2190 = vsub.s32 32, %v2189
        %v2191 = vshll.u32 %v2182, %v2189
        %v2192 = vshrl.u32 %v2174, %v2190
        %v2193 = vor.u32 %v2191, %v2192
        %v2194 = vsub.s32 4294967266, %v2189
        %v2195 = vadd.s32 %v2194, 127
        %v2196 = vshll.u32 %v2195, 23
        %v2197 = vor.u32 4788187, %v2196
        %v2198 = vand.u32 2147483647, %v2197
        %v2200 = vcvt.s32.f32 %v2193
        %v2201 = vmul.f32 %v2200, %v2198
        %v2202 = vxor.u32 %v2201, 2147483648
        %v2203 = vsel %vm2082, %v2202, %v2201
        %v2204 = vsub.s32 4, %v2180
        %v2205 = vsel %vm2082, %v2204, %v2180
        %v2206 = vsel %vm2081, %v664, %v2203
        %v2207 = vsel %vm2081, 0, %v2205
        %v2208 = vmul.f32 %v2206, %v2206
        %v2209 = vmul.f32 %v2208, -0.001358992
        %v2210 = vadd.f32 %v2209, 0.041655596
        %v2211 = vmul.f32 %v2208, %v2210
        %v2212 = vadd.f32 %v2211, -0.4999988
        %v2213 = vmul.f32 %v2208, %v2212
        %v2214 = vadd.f32 1.0, %v2213
        %v2215 = vmul.f32 %v2206, %v2206
        %v2216 = vmul.f32 %v2215, -0.00019511016
        %v2217 = vadd.f32 %v2216, 0.008332121
        %v2218 = vmul.f32 %v2215, %v2217
        %v2219 = vadd.f32 %v2218, -0.16666654
        %v2220 = vmul.f32 %v2215, %v2219
        %v2221 = vadd.f32 %v2220, 1.0
        %v2222 = vmul.f32 %v2221, %v2206
        %vm2223 = vweird.f32 %v664
        %v2224 = vand.u32 %v2207, 3
        %vm2225 = vcmp.lt.s32.totalorder %v2224, 2
        %vm2226 = vcmp.eq.s32.totalorder %v2224, 0
        %v2227 = vxor.u32 %v2222, 2147483648
        %v2228 = vsel %vm2226, %v2214, %v2227
        %vm2229 = vcmp.eq.s32.totalorder %v2224, 2
        %v2230 = vxor.u32 %v2214, 2147483648
        %v2231 = vsel %vm2229, %v2230, %v2222
        %v2232 = vsel %vm2225, %v2228, %v2231
        %v2233 = vsel %vm2223, nan, %v2232
        %v2234 = vand.u32 2147483647, %v429
        %vm2235 = vcmp.le.f32.partialorder %v2234, 0.7853982
        %vm2236 = vcmp.lt.s32.totalorder %v429, 0
        %v2237 = vand.u32 %v429, 2139095040
        %v2238 = vshrl.u32 %v2237, 23
        %v2239 = vsub.s32 %v2238, 127
        %v2240 = vand.u32 2147483647, %v429
        %v2241 = vand.u32 %v2240, 8388607
        %v2242 = vor.u32 %v2241, 8388608
        %v2243 = vsub.s32 0, %v2242
        %v2244 = vadd.s32 %v2239, 1
        %vm2245 = vcmp.gt.s32.totalorder %v2244, 0
        %v2246 = vsel %vm2245, %v2244, 0
        %v2247 = vshrl.u32 %v2246, 5
        %v2248 = vand.u32 %v2246, 31
        %v2249 = vsub.s32 32, %v2248
        %v2250 = vshrl.u32 683565275, %v2249
        %v2251 = vshll.u32 683565275, %v2248
        %v2252 = vshrl.u32 2475754826, %v2249
        %v2253 = vor.u32 %v2251, %v2252
        %v2254 = vshll.u32 2475754826, %v2248
        %v2255 = vshrl.u32 2131351028, %v2249
        %v2256 = vor.u32 %v2254, %v2255
        %v2257 = vshll.u32 2131351028, %v2248
        %v2258 = vshrl.u32 2102212464, %v2249
        %v2259 = vor.u32 %v2257, %v2258
        %v2260 = vshll.u32 2102212464, %v2248
        %v2261 = vshrl.u32 920167782, %v2249
        %v2262 = vor.u32 %v2260, %v2261
        %v2263 = vshll.u32 920167782, %v2248
        %v2264 = vshrl.u32 1326507024, %v2249
        %v2265 = vor.u32 %v2263, %v2264
        %vm2266 = vcmp.lt.s32.totalorder %v2247, 1
        %vm2267 = vcmp.lt.s32.totalorder %v2247, 2
        %vm2268 = vcmp.lt.s32.totalorder %v2247, 3
        %vm2269 = vcmp.lt.s32.totalorder %v2247, 4
        %v2270 = vsel %vm2266, %v2250, %v2253
        %v2271 = vsel %vm2269, %v2259, 2102212464
        %v2272 = vsel %vm2268, %v2256, %v2271
        %v2273 = vsel %vm2267, %v2270, %v2272
        %v2274 = vsel %vm2266, %v2253, %v2256
        %v2275 = vsel %vm2269, %v2262, 920167782
        %v2276 = vsel %vm2268, %v2259, %v2275
        %v2277 = vsel %vm2267, %v2274, %v2276
        %v2278 = vsel %vm2266, %v2256, %v2259
        %v2279 = vsel %vm2269, %v2265, 1326507024
        %v2280 = vsel %vm2268, %v2262, %v2279
        %v2281 = vsel %vm2267, %v2278, %v2280
        %v2282 = vshll.u32 %v2242, 8
        %v2283 = vand.u32 %v2282, 65535
        %v2284 = vshrl.u32 %v2282, 16
        %v2285 = vand.u32 %v2281, 65535
        %v2286 = vshrl.u32 %v2281, 16
        %v2287 = vmul.u32 %v2283, %v2285
        %v2288 = vmul.u32 %v2283, %v2286
        %v2289 = vmul.u32 %v2284, %v2285
        %v2290 = vmul.u32 %v2284, %v2286
        %v2291 = vshll.u32 %v2288, 16
        %v2292 = vshrl.u32 %v2288, 16
        %v2293 = vshll.u32 %v2289, 16
        %v2294 = vshrl.u32 %v2289, 16
        %vm2295 = vc.u32 %v2287, %v2291
        %v2296 = vsel %vm2295, 1, 0
        %v2297 = vadd.s32 %v2287, %v2291
        %v2298 = vadd.s32 %v2290, %v2296
        %vm2299 = vc.u32 %v2297, %v2293
        %v2300 = vsel %vm2299, 1, 0
        %v2301 = vadd.s32 %v2297, %v2293
        %v2302 = vadd.s32 %v2298, %v2300
        %v2303 = vadd.s32 %v2302, %v2292
        %v2304 = vadd.s32 %v2303, %v2294
        %v2305 = vand.u32 %v2282, 65535
        %v2306 = vshrl.u32 %v2282, 16
        %v2307 = vand.u32 %v2277, 65535
        %v2308 = vshrl.u32 %v2277, 16
        %v2309 = vmul.u32 %v2305, %v2307
        %v2310 = vmul.u32 %v2305, %v2308
        %v2311 = vmul.u32 %v2306, %v2307
        %v2312 = vmul.u32 %v2306, %v2308
        %v2313 = vshll.u32 %v2310, 16
        %v2314 = vshrl.u32 %v2310, 16
        %v2315 = vshll.u32 %v2311, 16
        %v2316 = vshrl.u32 %v2311, 16
        %vm2317 = vc.u32 %v2309, %v2313
        %v2318 = vsel %vm2317, 1, 0
        %v2319 = vadd.s32 %v2309, %v2313
        %v2320 = vadd.s32 %v2312, %v2318
        %vm2321 = vc.u32 %v2319, %v2315
        %v2322 = vsel %vm2321, 1, 0
        %v2323 = vadd.s32 %v2319, %v2315
        %v2324 = vadd.s32 %v2320, %v2322
        %v2325 = vadd.s32 %v2324, %v2314
        %v2326 = vadd.s32 %v2325, %v2316
        %v2327 = vmul.u32 %v2282, %v2273
        %v2328 = vadd.s32 %v2304, %v2323
        %vm2329 = vc.u32 %v2304, %v2323
        %v2330 = vadd.s32 %v2326, 1
        %v2331 = vsel %vm2329, %v2330, %v2326
        %v2332 = vadd.s32 %v2327, %v2331
        %v2333 = vadd.s32 %v2332, 536870912
        %v2334 = vshrl.u32 %v2333, 30
        %v2335 = vshll.u32 %v2334, 30
        %v2336 = vsub.s32 %v2332, %v2335
        %vm2337 = vcmp.lt.s32.totalorder %v2336, 0
        %v2338 = vsub.s32 0, %v2336
        %v2339 = vsel %vm2337, %v2338, %v2336
        %v2340 = vclz %v2339
        %v2341 = vsub.s32 %v2340, 2
        %vm2342 = vcmp.gt.s32.totalorder 0, %v2341
        %v2343 = vsel %vm2342, 0, %v2341
        %v2344 = vsub.s32 32, %v2343
        %v2345 = vshll.u32 %v2336, %v2343
        %v2346 = vshrl.u32 %v2328, %v2344
        %v2347 = vor.u32 %v2345, %v2346
        %v2348 = vsub.s32 4294967266, %v2343
        %v2349 = vadd.s32 %v2348, 127
        %v2350 = vshll.u32 %v2349, 23
        %v2351 = vor.u32 4788187, %v2350
        %v2352 = vand.u32 2147483647, %v2351
        %v2354 = vcvt.s32.f32 %v2347
        %v2355 = vmul.f32 %v2354, %v2352
        %v2356 = vxor.u32 %v2355, 2147483648
        %v2357 = vsel %vm2236, %v2356, %v2355
        %v2358 = vsub.s32 4, %v2334
        %v2359 = vsel %vm2236, %v2358, %v2334
        %v2360 = vsel %vm2235, %v429, %v2357
        %v2361 = vsel %vm2235, 0, %v2359
        %v2362 = vmul.f32 %v2360, %v2360
        %v2363 = vmul.f32 %v2362, -0.001358992
        %v2364 = vadd.f32 %v2363, 0.041655596
        %v2365 = vmul.f32 %v2362, %v2364
        %v2366 = vadd.f32 %v2365, -0.4999988
        %v2367 = vmul.f32 %v2362, %v2366
        %v2368 = vadd.f32 1.0, %v2367
        %v2369 = vmul.f32 %v2360, %v2360
        %v2370 = vmul.f32 %v2369, -0.00019511016
        %v2371 = vadd.f32 %v2370, 0.008332121
        %v2372 = vmul.f32 %v2369, %v2371
        %v2373 = vadd.f32 %v2372, -0.16666654
        %v2374 = vmul.f32 %v2369, %v2373
        %v2375 = vadd.f32 %v2374, 1.0
        %v2376 = vmul.f32 %v2375, %v2360
        %vm2377 = vweird.f32 %v429
        %v2378 = vand.u32 %v2361, 3
        %vm2379 = vcmp.lt.s32.totalorder %v2378, 2
        %vm2380 = vcmp.eq.s32.totalorder %v2378, 0
        %v2381 = vxor.u32 %v2376, 2147483648
        %v2382 = vsel %vm2380, %v2368, %v2381
        %vm2383 = vcmp.eq.s32.totalorder %v2378, 2
        %v2384 = vxor.u32 %v2368, 2147483648
        %v2385 = vsel %vm2383, %v2384, %v2376
        %v2386 = vsel %vm2379, %v2382, %v2385
        %v2387 = vsel %vm2377, nan, %v2386
        %v2388 = vand.u32 2147483647, %v668
        %vm2389 = vcmp.le.f32.partialorder %v2388, 0.7853982
        %vm2390 = vcmp.lt.s32.totalorder %v668, 0
        %v2391 = vand.u32 %v668, 2139095040
        %v2392 = vshrl.u32 %v2391, 23
        %v2393 = vsub.s32 %v2392, 127
        %v2394 = vand.u32 2147483647, %v668
        %v2395 = vand.u32 %v2394, 8388607
        %v2396 = vor.u32 %v2395, 8388608
        %v2397 = vsub.s32 0, %v2396
        %v2398 = vadd.s32 %v2393, 1
        %vm2399 = vcmp.gt.s32.totalorder %v2398, 0
        %v2400 = vsel %vm2399, %v2398, 0
        %v2401 = vshrl.u32 %v2400, 5
        %v2402 = vand.u32 %v2400, 31
        %v2403 = vsub.s32 32, %v2402
        %v2404 = vshrl.u32 683565275, %v2403
        %v2405 = vshll.u32 683565275, %v2402
        %v2406 = vshrl.u32 2475754826, %v2403
        %v2407 = vor.u32 %v2405, %v2406
        %v2408 = vshll.u32 2475754826, %v2402
        %v2409 = vshrl.u32 2131351028, %v2403
        %v2410 = vor.u32 %v2408, %v2409
        %v2411 = vshll.u32 2131351028, %v2402
        %v2412 = vshrl.u32 2102212464, %v2403
        %v2413 = vor.u32 %v2411, %v2412
        %v2414 = vshll.u32 2102212464, %v2402
        %v2415 = vshrl.u32 920167782, %v2403
        %v2416 = vor.u32 %v2414, %v2415
        %v2417 = vshll.u32 920167782, %v2402
        %v2418 = vshrl.u32 1326507024, %v2403
        %v2419 = vor.u32 %v2417, %v2418
        %vm2420 = vcmp.lt.s32.totalorder %v2401, 1
        %vm2421 = vcmp.lt.s32.totalorder %v2401, 2
        %vm2422 = vcmp.lt.s32.totalorder %v2401, 3
        %vm2423 = vcmp.lt.s32.totalorder %v2401, 4
        %v2424 = vsel %vm2420, %v2404, %v2407
        %v2425 = vsel %vm2423, %v2413, 2102212464
        %v2426 = vsel %vm2422, %v2410, %v2425
        %v2427 = vsel %vm2421, %v2424, %v2426
        %v2428 = vsel %vm2420, %v2407, %v2410
        %v2429 = vsel %vm2423, %v2416, 920167782
        %v2430 = vsel %vm2422, %v2413, %v2429
        %v2431 = vsel %vm2421, %v2428, %v2430
        %v2432 = vsel %vm2420, %v2410, %v2413
        %v2433 = vsel %vm2423, %v2419, 1326507024
        %v2434 = vsel %vm2422, %v2416, %v2433
        %v2435 = vsel %vm2421, %v2432, %v2434
        %v2436 = vshll.u32 %v2396, 8
        %v2437 = vand.u32 %v2436, 65535
        %v2438 = vshrl.u32 %v2436, 16
        %v2439 = vand.u32 %v2435, 65535
        %v2440 = vshrl.u32 %v2435, 16
        %v2441 = vmul.u32 %v2437, %v2439
        %v2442 = vmul.u32 %v2437, %v2440
        %v2443 = vmul.u32 %v2438, %v2439
        %v2444 = vmul.u32 %v2438, %v2440
        %v2445 = vshll.u32 %v2442, 16
        %v2446 = vshrl.u32 %v2442, 16
        %v2447 = vshll.u32 %v2443, 16
        %v2448 = vshrl.u32 %v2443, 16
        %vm2449 = vc.u32 %v2441, %v2445
        %v2450 = vsel %vm2449, 1, 0
        %v2451 = vadd.s32 %v2441, %v2445
        %v2452 = vadd.s32 %v2444, %v2450
        %vm2453 = vc.u32 %v2451, %v2447
        %v2454 = vsel %vm2453, 1, 0
        %v2455 = vadd.s32 %v2451, %v2447
        %v2456 = vadd.s32 %v2452, %v2454
        %v2457 = vadd.s32 %v2456, %v2446
        %v2458 = vadd.s32 %v2457, %v2448
        %v2459 = vand.u32 %v2436, 65535
        %v2460 = vshrl.u32 %v2436, 16
        %v2461 = vand.u32 %v2431, 65535
        %v2462 = vshrl.u32 %v2431, 16
        %v2463 = vmul.u32 %v2459, %v2461
        %v2464 = vmul.u32 %v2459, %v2462
        %v2465 = vmul.u32 %v2460, %v2461
        %v2466 = vmul.u32 %v2460, %v2462
        %v2467 = vshll.u32 %v2464, 16
        %v2468 = vshrl.u32 %v2464, 16
        %v2469 = vshll.u32 %v2465, 16
        %v2470 = vshrl.u32 %v2465, 16
        %vm2471 = vc.u32 %v2463, %v2467
        %v2472 = vsel %vm2471, 1, 0
        %v2473 = vadd.s32 %v2463, %v2467
        %v2474 = vadd.s32 %v2466, %v2472
        %vm2475 = vc.u32 %v2473, %v2469
        %v2476 = vsel %vm2475, 1, 0
        %v2477 = vadd.s32 %v2473, %v2469
        %v2478 = vadd.s32 %v2474, %v2476
        %v2479 = vadd.s32 %v2478, %v2468
        %v2480 = vadd.s32 %v2479, %v2470
        %v2481 = vmul.u32 %v2436, %v2427
        %v2482 = vadd.s32 %v2458, %v2477
        %vm2483 = vc.u32 %v2458, %v2477
        %v2484 = vadd.s32 %v2480, 1
        %v2485 = vsel %vm2483, %v2484, %v2480
        %v2486 = vadd.s32 %v2481, %v2485
        %v2487 = vadd.s32 %v2486, 536870912
        %v2488 = vshrl.u32 %v2487, 30
        %v2489 = vshll.u32 %v2488, 30
        %v2490 = vsub.s32 %v2486, %v2489
        %vm2491 = vcmp.lt.s32.totalorder %v2490, 0
        %v2492 = vsub.s32 0, %v2490
        %v2493 = vsel %vm2491, %v2492, %v2490
        %v2494 = vclz %v2493
        %v2495 = vsub.s32 %v2494, 2
        %vm2496 = vcmp.gt.s32.totalorder 0, %v2495
        %v2497 = vsel %vm2496, 0, %v2495
        %v2498 = vsub.s32 32, %v2497
        %v2499 = vshll.u32 %v2490, %v2497
        %v2500 = vshrl.u32 %v2482, %v2498
        %v2501 = vor.u32 %v2499, %v2500
        %v2502 = vsub.s32 4294967266, %v2497
        %v2503 = vadd.s32 %v2502, 127
        %v2504 = vshll.u32 %v2503, 23
        %v2505 = vor.u32 4788187, %v2504
        %v2506 = vand.u32 2147483647, %v2505
        %v2508 = vcvt.s32.f32 %v2501
        %v2509 = vmul.f32 %v2508, %v2506
        %v2510 = vxor.u32 %v2509, 2147483648
        %v2511 = vsel %vm2390, %v2510, %v2509
        %v2512 = vsub.s32 4, %v2488
        %v2513 = vsel %vm2390, %v2512, %v2488
        %v2514 = vsel %vm2389, %v668, %v2511
        %v2515 = vsel %vm2389, 0, %v2513
        %v2516 = vmul.f32 %v2514, %v2514
        %v2517 = vmul.f32 %v2516, -0.001358992
        %v2518 = vadd.f32 %v2517, 0.041655596
        %v2519 = vmul.f32 %v2516, %v2518
        %v2520 = vadd.f32 %v2519, -0.4999988
        %v2521 = vmul.f32 %v2516, %v2520
        %v2522 = vadd.f32 1.0, %v2521
        %v2523 = vmul.f32 %v2514, %v2514
        %v2524 = vmul.f32 %v2523, -0.00019511016
        %v2525 = vadd.f32 %v2524, 0.008332121
        %v2526 = vmul.f32 %v2523, %v2525
        %v2527 = vadd.f32 %v2526, -0.16666654
        %v2528 = vmul.f32 %v2523, %v2527
        %v2529 = vadd.f32 %v2528, 1.0
        %v2530 = vmul.f32 %v2529, %v2514
        %vm2531 = vweird.f32 %v668
        %v2532 = vand.u32 %v2515, 3
        %vm2533 = vcmp.lt.s32.totalorder %v2532, 2
        %vm2534 = vcmp.eq.s32.totalorder %v2532, 0
        %v2535 = vxor.u32 %v2530, 2147483648
        %v2536 = vsel %vm2534, %v2522, %v2535
        %vm2537 = vcmp.eq.s32.totalorder %v2532, 2
        %v2538 = vxor.u32 %v2522, 2147483648
        %v2539 = vsel %vm2537, %v2538, %v2530
        %v2540 = vsel %vm2533, %v2536, %v2539
        %v2541 = vsel %vm2531, nan, %v2540
        %v2542 = vand.u32 2147483647, %v433
        %vm2543 = vcmp.le.f32.partialorder %v2542, 0.7853982
        %vm2544 = vcmp.lt.s32.totalorder %v433, 0
        %v2545 = vand.u32 %v433, 2139095040
        %v2546 = vshrl.u32 %v2545, 23
        %v2547 = vsub.s32 %v2546, 127
        %v2548 = vand.u32 2147483647, %v433
        %v2549 = vand.u32 %v2548, 8388607
        %v2550 = vor.u32 %v2549, 8388608
        %v2551 = vsub.s32 0, %v2550
        %v2552 = vadd.s32 %v2547, 1
        %vm2553 = vcmp.gt.s32.totalorder %v2552, 0
        %v2554 = vsel %vm2553, %v2552, 0
        %v2555 = vshrl.u32 %v2554, 5
        %v2556 = vand.u32 %v2554, 31
        %v2557 = vsub.s32 32, %v2556
        %v2558 = vshrl.u32 683565275, %v2557
        %v2559 = vshll.u32 683565275, %v2556
        %v2560 = vshrl.u32 2475754826, %v2557
        %v2561 = vor.u32 %v2559, %v2560
        %v2562 = vshll.u32 2475754826, %v2556
        %v2563 = vshrl.u32 2131351028, %v2557
        %v2564 = vor.u32 %v2562, %v2563
        %v2565 = vshll.u32 2131351028, %v2556
        %v2566 = vshrl.u32 2102212464, %v2557
        %v2567 = vor.u32 %v2565, %v2566
        %v2568 = vshll.u32 2102212464, %v2556
        %v2569 = vshrl.u32 920167782, %v2557
        %v2570 = vor.u32 %v2568, %v2569
        %v2571 = vshll.u32 920167782, %v2556
        %v2572 = vshrl.u32 1326507024, %v2557
        %v2573 = vor.u32 %v2571, %v2572
        %vm2574 = vcmp.lt.s32.totalorder %v2555, 1
        %vm2575 = vcmp.lt.s32.totalorder %v2555, 2
        %vm2576 = vcmp.lt.s32.totalorder %v2555, 3
        %vm2577 = vcmp.lt.s32.totalorder %v2555, 4
        %v2578 = vsel %vm2574, %v2558, %v2561
        %v2579 = vsel %vm2577, %v2567, 2102212464
        %v2580 = vsel %vm2576, %v2564, %v2579
        %v2581 = vsel %vm2575, %v2578, %v2580
        %v2582 = vsel %vm2574, %v2561, %v2564
        %v2583 = vsel %vm2577, %v2570, 920167782
        %v2584 = vsel %vm2576, %v2567, %v2583
        %v2585 = vsel %vm2575, %v2582, %v2584
        %v2586 = vsel %vm2574, %v2564, %v2567
        %v2587 = vsel %vm2577, %v2573, 1326507024
        %v2588 = vsel %vm2576, %v2570, %v2587
        %v2589 = vsel %vm2575, %v2586, %v2588
        %v2590 = vshll.u32 %v2550, 8
        %v2591 = vand.u32 %v2590, 65535
        %v2592 = vshrl.u32 %v2590, 16
        %v2593 = vand.u32 %v2589, 65535
        %v2594 = vshrl.u32 %v2589, 16
        %v2595 = vmul.u32 %v2591, %v2593
        %v2596 = vmul.u32 %v2591, %v2594
        %v2597 = vmul.u32 %v2592, %v2593
        %v2598 = vmul.u32 %v2592, %v2594
        %v2599 = vshll.u32 %v2596, 16
        %v2600 = vshrl.u32 %v2596, 16
        %v2601 = vshll.u32 %v2597, 16
        %v2602 = vshrl.u32 %v2597, 16
        %vm2603 = vc.u32 %v2595, %v2599
        %v2604 = vsel %vm2603, 1, 0
        %v2605 = vadd.s32 %v2595, %v2599
        %v2606 = vadd.s32 %v2598, %v2604
        %vm2607 = vc.u32 %v2605, %v2601
        %v2608 = vsel %vm2607, 1, 0
        %v2609 = vadd.s32 %v2605, %v2601
        %v2610 = vadd.s32 %v2606, %v2608
        %v2611 = vadd.s32 %v2610, %v2600
        %v2612 = vadd.s32 %v2611, %v2602
        %v2613 = vand.u32 %v2590, 65535
        %v2614 = vshrl.u32 %v2590, 16
        %v2615 = vand.u32 %v2585, 65535
        %v2616 = vshrl.u32 %v2585, 16
        %v2617 = vmul.u32 %v2613, %v2615
        %v2618 = vmul.u32 %v2613, %v2616
        %v2619 = vmul.u32 %v2614, %v2615
        %v2620 = vmul.u32 %v2614, %v2616
        %v2621 = vshll.u32 %v2618, 16
        %v2622 = vshrl.u32 %v2618, 16
        %v2623 = vshll.u32 %v2619, 16
        %v2624 = vshrl.u32 %v2619, 16
        %vm2625 = vc.u32 %v2617, %v2621
        %v2626 = vsel %vm2625, 1, 0
        %v2627 = vadd.s32 %v2617, %v2621
        %v2628 = vadd.s32 %v2620, %v2626
        %vm2629 = vc.u32 %v2627, %v2623
        %v2630 = vsel %vm2629, 1, 0
        %v2631 = vadd.s32 %v2627, %v2623
        %v2632 = vadd.s32 %v2628, %v2630
        %v2633 = vadd.s32 %v2632, %v2622
        %v2634 = vadd.s32 %v2633, %v2624
        %v2635 = vmul.u32 %v2590, %v2581
        %v2636 = vadd.s32 %v2612, %v2631
        %vm2637 = vc.u32 %v2612, %v2631
        %v2638 = vadd.s32 %v2634, 1
        %v2639 = vsel %vm2637, %v2638, %v2634
        %v2640 = vadd.s32 %v2635, %v2639
        %v2641 = vadd.s32 %v2640, 536870912
        %v2642 = vshrl.u32 %v2641, 30
        %v2643 = vshll.u32 %v2642, 30
        %v2644 = vsub.s32 %v2640, %v2643
        %vm2645 = vcmp.lt.s32.totalorder %v2644, 0
        %v2646 = vsub.s32 0, %v2644
        %v2647 = vsel %vm2645, %v2646, %v2644
        %v2648 = vclz %v2647
        %v2649 = vsub.s32 %v2648, 2
        %vm2650 = vcmp.gt.s32.totalorder 0, %v2649
        %v2651 = vsel %vm2650, 0, %v2649
        %v2652 = vsub.s32 32, %v2651
        %v2653 = vshll.u32 %v2644, %v2651
        %v2654 = vshrl.u32 %v2636, %v2652
        %v2655 = vor.u32 %v2653, %v2654
        %v2656 = vsub.s32 4294967266, %v2651
        %v2657 = vadd.s32 %v2656, 127
        %v2658 = vshll.u32 %v2657, 23
        %v2659 = vor.u32 4788187, %v2658
        %v2660 = vand.u32 2147483647, %v2659
        %v2662 = vcvt.s32.f32 %v2655
        %v2663 = vmul.f32 %v2662, %v2660
        %v2664 = vxor.u32 %v2663, 2147483648
        %v2665 = vsel %vm2544, %v2664, %v2663
        %v2666 = vsub.s32 4, %v2642
        %v2667 = vsel %vm2544, %v2666, %v2642
        %v2668 = vsel %vm2543, %v433, %v2665
        %v2669 = vsel %vm2543, 0, %v2667
        %v2670 = vmul.f32 %v2668, %v2668
        %v2671 = vmul.f32 %v2670, -0.001358992
        %v2672 = vadd.f32 %v2671, 0.041655596
        %v2673 = vmul.f32 %v2670, %v2672
        %v2674 = vadd.f32 %v2673, -0.4999988
        %v2675 = vmul.f32 %v2670, %v2674
        %v2676 = vadd.f32 1.0, %v2675
        %v2677 = vmul.f32 %v2668, %v2668
        %v2678 = vmul.f32 %v2677, -0.00019511016
        %v2679 = vadd.f32 %v2678, 0.008332121
        %v2680 = vmul.f32 %v2677, %v2679
        %v2681 = vadd.f32 %v2680, -0.16666654
        %v2682 = vmul.f32 %v2677, %v2681
        %v2683 = vadd.f32 %v2682, 1.0
        %v2684 = vmul.f32 %v2683, %v2668
        %vm2685 = vweird.f32 %v433
        %v2686 = vand.u32 %v2669, 3
        %vm2687 = vcmp.lt.s32.totalorder %v2686, 2
        %vm2688 = vcmp.eq.s32.totalorder %v2686, 0
        %v2689 = vxor.u32 %v2684, 2147483648
        %v2690 = vsel %vm2688, %v2676, %v2689
        %vm2691 = vcmp.eq.s32.totalorder %v2686, 2
        %v2692 = vxor.u32 %v2676, 2147483648
        %v2693 = vsel %vm2691, %v2692, %v2684
        %v2694 = vsel %vm2687, %v2690, %v2693
        %v2695 = vsel %vm2685, nan, %v2694
        %v2696 = vand.u32 2147483647, %v672
        %vm2697 = vcmp.le.f32.partialorder %v2696, 0.7853982
        %vm2698 = vcmp.lt.s32.totalorder %v672, 0
        %v2699 = vand.u32 %v672, 2139095040
        %v2700 = vshrl.u32 %v2699, 23
        %v2701 = vsub.s32 %v2700, 127
        %v2702 = vand.u32 2147483647, %v672
        %v2703 = vand.u32 %v2702, 8388607
        %v2704 = vor.u32 %v2703, 8388608
        %v2705 = vsub.s32 0, %v2704
        %v2706 = vadd.s32 %v2701, 1
        %vm2707 = vcmp.gt.s32.totalorder %v2706, 0
        %v2708 = vsel %vm2707, %v2706, 0
        %v2709 = vshrl.u32 %v2708, 5
        %v2710 = vand.u32 %v2708, 31
        %v2711 = vsub.s32 32, %v2710
        %v2712 = vshrl.u32 683565275, %v2711
        %v2713 = vshll.u32 683565275, %v2710
        %v2714 = vshrl.u32 2475754826, %v2711
        %v2715 = vor.u32 %v2713, %v2714
        %v2716 = vshll.u32 2475754826, %v2710
        %v2717 = vshrl.u32 2131351028, %v2711
        %v2718 = vor.u32 %v2716, %v2717
        %v2719 = vshll.u32 2131351028, %v2710
        %v2720 = vshrl.u32 2102212464, %v2711
        %v2721 = vor.u32 %v2719, %v2720
        %v2722 = vshll.u32 2102212464, %v2710
        %v2723 = vshrl.u32 920167782, %v2711
        %v2724 = vor.u32 %v2722, %v2723
        %v2725 = vshll.u32 920167782, %v2710
        %v2726 = vshrl.u32 1326507024, %v2711
        %v2727 = vor.u32 %v2725, %v2726
        %vm2728 = vcmp.lt.s32.totalorder %v2709, 1
        %vm2729 = vcmp.lt.s32.totalorder %v2709, 2
        %vm2730 = vcmp.lt.s32.totalorder %v2709, 3
        %vm2731 = vcmp.lt.s32.totalorder %v2709, 4
        %v2732 = vsel %vm2728, %v2712, %v2715
        %v2733 = vsel %vm2731, %v2721, 2102212464
        %v2734 = vsel %vm2730, %v2718, %v2733
        %v2735 = vsel %vm2729, %v2732, %v2734
        %v2736 = vsel %vm2728, %v2715, %v2718
        %v2737 = vsel %vm2731, %v2724, 920167782
        %v2738 = vsel %vm2730, %v2721, %v2737
        %v2739 = vsel %vm2729, %v2736, %v2738
        %v2740 = vsel %vm2728, %v2718, %v2721
        %v2741 = vsel %vm2731, %v2727, 1326507024
        %v2742 = vsel %vm2730, %v2724, %v2741
        %v2743 = vsel %vm2729, %v2740, %v2742
        %v2744 = vshll.u32 %v2704, 8
        %v2745 = vand.u32 %v2744, 65535
        %v2746 = vshrl.u32 %v2744, 16
        %v2747 = vand.u32 %v2743, 65535
        %v2748 = vshrl.u32 %v2743, 16
        %v2749 = vmul.u32 %v2745, %v2747
        %v2750 = vmul.u32 %v2745, %v2748
        %v2751 = vmul.u32 %v2746, %v2747
        %v2752 = vmul.u32 %v2746, %v2748
        %v2753 = vshll.u32 %v2750, 16
        %v2754 = vshrl.u32 %v2750, 16
        %v2755 = vshll.u32 %v2751, 16
        %v2756 = vshrl.u32 %v2751, 16
        %vm2757 = vc.u32 %v2749, %v2753
        %v2758 = vsel %vm2757, 1, 0
        %v2759 = vadd.s32 %v2749, %v2753
        %v2760 = vadd.s32 %v2752, %v2758
        %vm2761 = vc.u32 %v2759, %v2755
        %v2762 = vsel %vm2761, 1, 0
        %v2763 = vadd.s32 %v2759, %v2755
        %v2764 = vadd.s32 %v2760, %v2762
        %v2765 = vadd.s32 %v2764, %v2754
        %v2766 = vadd.s32 %v2765, %v2756
        %v2767 = vand.u32 %v2744, 65535
        %v2768 = vshrl.u32 %v2744, 16
        %v2769 = vand.u32 %v2739, 65535
        %v2770 = vshrl.u32 %v2739, 16
        %v2771 = vmul.u32 %v2767, %v2769
        %v2772 = vmul.u32 %v2767, %v2770
        %v2773 = vmul.u32 %v2768, %v2769
        %v2774 = vmul.u32 %v2768, %v2770
        %v2775 = vshll.u32 %v2772, 16
        %v2776 = vshrl.u32 %v2772, 16
        %v2777 = vshll.u32 %v2773, 16
        %v2778 = vshrl.u32 %v2773, 16
        %vm2779 = vc.u32 %v2771, %v2775
        %v2780 = vsel %vm2779, 1, 0
        %v2781 = vadd.s32 %v2771, %v2775
        %v2782 = vadd.s32 %v2774, %v2780
        %vm2783 = vc.u32 %v2781, %v2777
        %v2784 = vsel %vm2783, 1, 0
        %v2785 = vadd.s32 %v2781, %v2777
        %v2786 = vadd.s32 %v2782, %v2784
        %v2787 = vadd.s32 %v2786, %v2776
        %v2788 = vadd.s32 %v2787, %v2778
        %v2789 = vmul.u32 %v2744, %v2735
        %v2790 = vadd.s32 %v2766, %v2785
        %vm2791 = vc.u32 %v2766, %v2785
        %v2792 = vadd.s32 %v2788, 1
        %v2793 = vsel %vm2791, %v2792, %v2788
        %v2794 = vadd.s32 %v2789, %v2793
        %v2795 = vadd.s32 %v2794, 536870912
        %v2796 = vshrl.u32 %v2795, 30
        %v2797 = vshll.u32 %v2796, 30
        %v2798 = vsub.s32 %v2794, %v2797
        %vm2799 = vcmp.lt.s32.totalorder %v2798, 0
        %v2800 = vsub.s32 0, %v2798
        %v2801 = vsel %vm2799, %v2800, %v2798
        %v2802 = vclz %v2801
        %v2803 = vsub.s32 %v2802, 2
        %vm2804 = vcmp.gt.s32.totalorder 0, %v2803
        %v2805 = vsel %vm2804, 0, %v2803
        %v2806 = vsub.s32 32, %v2805
        %v2807 = vshll.u32 %v2798, %v2805
        %v2808 = vshrl.u32 %v2790, %v2806
        %v2809 = vor.u32 %v2807, %v2808
        %v2810 = vsub.s32 4294967266, %v2805
        %v2811 = vadd.s32 %v2810, 127
        %v2812 = vshll.u32 %v2811, 23
        %v2813 = vor.u32 4788187, %v2812
        %v2814 = vand.u32 2147483647, %v2813
        %v2816 = vcvt.s32.f32 %v2809
        %v2817 = vmul.f32 %v2816, %v2814
        %v2818 = vxor.u32 %v2817, 2147483648
        %v2819 = vsel %vm2698, %v2818, %v2817
        %v2820 = vsub.s32 4, %v2796
        %v2821 = vsel %vm2698, %v2820, %v2796
        %v2822 = vsel %vm2697, %v672, %v2819
        %v2823 = vsel %vm2697, 0, %v2821
        %v2824 = vmul.f32 %v2822, %v2822
        %v2825 = vmul.f32 %v2824, -0.001358992
        %v2826 = vadd.f32 %v2825, 0.041655596
        %v2827 = vmul.f32 %v2824, %v2826
        %v2828 = vadd.f32 %v2827, -0.4999988
        %v2829 = vmul.f32 %v2824, %v2828
        %v2830 = vadd.f32 1.0, %v2829
        %v2831 = vmul.f32 %v2822, %v2822
        %v2832 = vmul.f32 %v2831, -0.00019511016
        %v2833 = vadd.f32 %v2832, 0.008332121
        %v2834 = vmul.f32 %v2831, %v2833
        %v2835 = vadd.f32 %v2834, -0.16666654
        %v2836 = vmul.f32 %v2831, %v2835
        %v2837 = vadd.f32 %v2836, 1.0
        %v2838 = vmul.f32 %v2837, %v2822
        %vm2839 = vweird.f32 %v672
        %v2840 = vand.u32 %v2823, 3
        %vm2841 = vcmp.lt.s32.totalorder %v2840, 2
        %vm2842 = vcmp.eq.s32.totalorder %v2840, 0
        %v2843 = vxor.u32 %v2838, 2147483648
        %v2844 = vsel %vm2842, %v2830, %v2843
        %vm2845 = vcmp.eq.s32.totalorder %v2840, 2
        %v2846 = vxor.u32 %v2830, 2147483648
        %v2847 = vsel %vm2845, %v2846, %v2838
        %v2848 = vsel %vm2841, %v2844, %v2847
        %v2849 = vsel %vm2839, nan, %v2848
        %v2850 = vand.u32 2147483647, %v437
        %vm2851 = vcmp.le.f32.partialorder %v2850, 0.7853982
        %vm2852 = vcmp.lt.s32.totalorder %v437, 0
        %v2853 = vand.u32 %v437, 2139095040
        %v2854 = vshrl.u32 %v2853, 23
        %v2855 = vsub.s32 %v2854, 127
        %v2856 = vand.u32 2147483647, %v437
        %v2857 = vand.u32 %v2856, 8388607
        %v2858 = vor.u32 %v2857, 8388608
        %v2859 = vsub.s32 0, %v2858
        %v2860 = vadd.s32 %v2855, 1
        %vm2861 = vcmp.gt.s32.totalorder %v2860, 0
        %v2862 = vsel %vm2861, %v2860, 0
        %v2863 = vshrl.u32 %v2862, 5
        %v2864 = vand.u32 %v2862, 31
        %v2865 = vsub.s32 32, %v2864
        %v2866 = vshrl.u32 683565275, %v2865
        %v2867 = vshll.u32 683565275, %v2864
        %v2868 = vshrl.u32 2475754826, %v2865
        %v2869 = vor.u32 %v2867, %v2868
        %v2870 = vshll.u32 2475754826, %v2864
        %v2871 = vshrl.u32 2131351028, %v2865
        %v2872 = vor.u32 %v2870, %v2871
        %v2873 = vshll.u32 2131351028, %v2864
        %v2874 = vshrl.u32 2102212464, %v2865
        %v2875 = vor.u32 %v2873, %v2874
        %v2876 = vshll.u32 2102212464, %v2864
        %v2877 = vshrl.u32 920167782, %v2865
        %v2878 = vor.u32 %v2876, %v2877
        %v2879 = vshll.u32 920167782, %v2864
        %v2880 = vshrl.u32 1326507024, %v2865
        %v2881 = vor.u32 %v2879, %v2880
        %vm2882 = vcmp.lt.s32.totalorder %v2863, 1
        %vm2883 = vcmp.lt.s32.totalorder %v2863, 2
        %vm2884 = vcmp.lt.s32.totalorder %v2863, 3
        %vm2885 = vcmp.lt.s32.totalorder %v2863, 4
        %v2886 = vsel %vm2882, %v2866, %v2869
        %v2887 = vsel %vm2885, %v2875, 2102212464
        %v2888 = vsel %vm2884, %v2872, %v2887
        %v2889 = vsel %vm2883, %v2886, %v2888
        %v2890 = vsel %vm2882, %v2869, %v2872
        %v2891 = vsel %vm2885, %v2878, 920167782
        %v2892 = vsel %vm2884, %v2875, %v2891
        %v2893 = vsel %vm2883, %v2890, %v2892
        %v2894 = vsel %vm2882, %v2872, %v2875
        %v2895 = vsel %vm2885, %v2881, 1326507024
        %v2896 = vsel %vm2884, %v2878, %v2895
        %v2897 = vsel %vm2883, %v2894, %v2896
        %v2898 = vshll.u32 %v2858, 8
        %v2899 = vand.u32 %v2898, 65535
        %v2900 = vshrl.u32 %v2898, 16
        %v2901 = vand.u32 %v2897, 65535
        %v2902 = vshrl.u32 %v2897, 16
        %v2903 = vmul.u32 %v2899, %v2901
        %v2904 = vmul.u32 %v2899, %v2902
        %v2905 = vmul.u32 %v2900, %v2901
        %v2906 = vmul.u32 %v2900, %v2902
        %v2907 = vshll.u32 %v2904, 16
        %v2908 = vshrl.u32 %v2904, 16
        %v2909 = vshll.u32 %v2905, 16
        %v2910 = vshrl.u32 %v2905, 16
        %vm2911 = vc.u32 %v2903, %v2907
        %v2912 = vsel %vm2911, 1, 0
        %v2913 = vadd.s32 %v2903, %v2907
        %v2914 = vadd.s32 %v2906, %v2912
        %vm2915 = vc.u32 %v2913, %v2909
        %v2916 = vsel %vm2915, 1, 0
        %v2917 = vadd.s32 %v2913, %v2909
        %v2918 = vadd.s32 %v2914, %v2916
        %v2919 = vadd.s32 %v2918, %v2908
        %v2920 = vadd.s32 %v2919, %v2910
        %v2921 = vand.u32 %v2898, 65535
        %v2922 = vshrl.u32 %v2898, 16
        %v2923 = vand.u32 %v2893, 65535
        %v2924 = vshrl.u32 %v2893, 16
        %v2925 = vmul.u32 %v2921, %v2923
        %v2926 = vmul.u32 %v2921, %v2924
        %v2927 = vmul.u32 %v2922, %v2923
        %v2928 = vmul.u32 %v2922, %v2924
        %v2929 = vshll.u32 %v2926, 16
        %v2930 = vshrl.u32 %v2926, 16
        %v2931 = vshll.u32 %v2927, 16
        %v2932 = vshrl.u32 %v2927, 16
        %vm2933 = vc.u32 %v2925, %v2929
        %v2934 = vsel %vm2933, 1, 0
        %v2935 = vadd.s32 %v2925, %v2929
        %v2936 = vadd.s32 %v2928, %v2934
        %vm2937 = vc.u32 %v2935, %v2931
        %v2938 = vsel %vm2937, 1, 0
        %v2939 = vadd.s32 %v2935, %v2931
        %v2940 = vadd.s32 %v2936, %v2938
        %v2941 = vadd.s32 %v2940, %v2930
        %v2942 = vadd.s32 %v2941, %v2932
        %v2943 = vmul.u32 %v2898, %v2889
        %v2944 = vadd.s32 %v2920, %v2939
        %vm2945 = vc.u32 %v2920, %v2939
        %v2946 = vadd.s32 %v2942, 1
        %v2947 = vsel %vm2945, %v2946, %v2942
        %v2948 = vadd.s32 %v2943, %v2947
        %v2949 = vadd.s32 %v2948, 536870912
        %v2950 = vshrl.u32 %v2949, 30
        %v2951 = vshll.u32 %v2950, 30
        %v2952 = vsub.s32 %v2948, %v2951
        %vm2953 = vcmp.lt.s32.totalorder %v2952, 0
        %v2954 = vsub.s32 0, %v2952
        %v2955 = vsel %vm2953, %v2954, %v2952
        %v2956 = vclz %v2955
        %v2957 = vsub.s32 %v2956, 2
        %vm2958 = vcmp.gt.s32.totalorder 0, %v2957
        %v2959 = vsel %vm2958, 0, %v2957
        %v2960 = vsub.s32 32, %v2959
        %v2961 = vshll.u32 %v2952, %v2959
        %v2962 = vshrl.u32 %v2944, %v2960
        %v2963 = vor.u32 %v2961, %v2962
        %v2964 = vsub.s32 4294967266, %v2959
        %v2965 = vadd.s32 %v2964, 127
        %v2966 = vshll.u32 %v2965, 23
        %v2967 = vor.u32 4788187, %v2966
        %v2968 = vand.u32 2147483647, %v2967
        %v2970 = vcvt.s32.f32 %v2963
        %v2971 = vmul.f32 %v2970, %v2968
        %v2972 = vxor.u32 %v2971, 2147483648
        %v2973 = vsel %vm2852, %v2972, %v2971
        %v2974 = vsub.s32 4, %v2950
        %v2975 = vsel %vm2852, %v2974, %v2950
        %v2976 = vsel %vm2851, %v437, %v2973
        %v2977 = vsel %vm2851, 0, %v2975
        %v2978 = vmul.f32 %v2976, %v2976
        %v2979 = vmul.f32 %v2978, -0.001358992
        %v2980 = vadd.f32 %v2979, 0.041655596
        %v2981 = vmul.f32 %v2978, %v2980
        %v2982 = vadd.f32 %v2981, -0.4999988
        %v2983 = vmul.f32 %v2978, %v2982
        %v2984 = vadd.f32 1.0, %v2983
        %v2985 = vmul.f32 %v2976, %v2976
        %v2986 = vmul.f32 %v2985, -0.00019511016
        %v2987 = vadd.f32 %v2986, 0.008332121
        %v2988 = vmul.f32 %v2985, %v2987
        %v2989 = vadd.f32 %v2988, -0.16666654
        %v2990 = vmul.f32 %v2985, %v2989
        %v2991 = vadd.f32 %v2990, 1.0
        %v2992 = vmul.f32 %v2991, %v2976
        %vm2993 = vweird.f32 %v437
        %v2994 = vand.u32 %v2977, 3
        %vm2995 = vcmp.lt.s32.totalorder %v2994, 2
        %vm2996 = vcmp.eq.s32.totalorder %v2994, 0
        %v2997 = vxor.u32 %v2992, 2147483648
        %v2998 = vsel %vm2996, %v2984, %v2997
        %vm2999 = vcmp.eq.s32.totalorder %v2994, 2
        %v3000 = vxor.u32 %v2984, 2147483648
        %v3001 = vsel %vm2999, %v3000, %v2992
        %v3002 = vsel %vm2995, %v2998, %v3001
        %v3003 = vsel %vm2993, nan, %v3002
        %v3004 = vand.u32 2147483647, %v676
        %vm3005 = vcmp.le.f32.partialorder %v3004, 0.7853982
        %vm3006 = vcmp.lt.s32.totalorder %v676, 0
        %v3007 = vand.u32 %v676, 2139095040
        %v3008 = vshrl.u32 %v3007, 23
        %v3009 = vsub.s32 %v3008, 127
        %v3010 = vand.u32 2147483647, %v676
        %v3011 = vand.u32 %v3010, 8388607
        %v3012 = vor.u32 %v3011, 8388608
        %v3013 = vsub.s32 0, %v3012
        %v3014 = vadd.s32 %v3009, 1
        %vm3015 = vcmp.gt.s32.totalorder %v3014, 0
        %v3016 = vsel %vm3015, %v3014, 0
        %v3017 = vshrl.u32 %v3016, 5
        %v3018 = vand.u32 %v3016, 31
        %v3019 = vsub.s32 32, %v3018
        %v3020 = vshrl.u32 683565275, %v3019
        %v3021 = vshll.u32 683565275, %v3018
        %v3022 = vshrl.u32 2475754826, %v3019
        %v3023 = vor.u32 %v3021, %v3022
        %v3024 = vshll.u32 2475754826, %v3018
        %v3025 = vshrl.u32 2131351028, %v3019
        %v3026 = vor.u32 %v3024, %v3025
        %v3027 = vshll.u32 2131351028, %v3018
        %v3028 = vshrl.u32 2102212464, %v3019
        %v3029 = vor.u32 %v3027, %v3028
        %v3030 = vshll.u32 2102212464, %v3018
        %v3031 = vshrl.u32 920167782, %v3019
        %v3032 = vor.u32 %v3030, %v3031
        %v3033 = vshll.u32 920167782, %v3018
        %v3034 = vshrl.u32 1326507024, %v3019
        %v3035 = vor.u32 %v3033, %v3034
        %vm3036 = vcmp.lt.s32.totalorder %v3017, 1
        %vm3037 = vcmp.lt.s32.totalorder %v3017, 2
        %vm3038 = vcmp.lt.s32.totalorder %v3017, 3
        %vm3039 = vcmp.lt.s32.totalorder %v3017, 4
        %v3040 = vsel %vm3036, %v3020, %v3023
        %v3041 = vsel %vm3039, %v3029, 2102212464
        %v3042 = vsel %vm3038, %v3026, %v3041
        %v3043 = vsel %vm3037, %v3040, %v3042
        %v3044 = vsel %vm3036, %v3023, %v3026
        %v3045 = vsel %vm3039, %v3032, 920167782
        %v3046 = vsel %vm3038, %v3029, %v3045
        %v3047 = vsel %vm3037, %v3044, %v3046
        %v3048 = vsel %vm3036, %v3026, %v3029
        %v3049 = vsel %vm3039, %v3035, 1326507024
        %v3050 = vsel %vm3038, %v3032, %v3049
        %v3051 = vsel %vm3037, %v3048, %v3050
        %v3052 = vshll.u32 %v3012, 8
        %v3053 = vand.u32 %v3052, 65535
        %v3054 = vshrl.u32 %v3052, 16
        %v3055 = vand.u32 %v3051, 65535
        %v3056 = vshrl.u32 %v3051, 16
        %v3057 = vmul.u32 %v3053, %v3055
        %v3058 = vmul.u32 %v3053, %v3056
        %v3059 = vmul.u32 %v3054, %v3055
        %v3060 = vmul.u32 %v3054, %v3056
        %v3061 = vshll.u32 %v3058, 16
        %v3062 = vshrl.u32 %v3058, 16
        %v3063 = vshll.u32 %v3059, 16
        %v3064 = vshrl.u32 %v3059, 16
        %vm3065 = vc.u32 %v3057, %v3061
        %v3066 = vsel %vm3065, 1, 0
        %v3067 = vadd.s32 %v3057, %v3061
        %v3068 = vadd.s32 %v3060, %v3066
        %vm3069 = vc.u32 %v3067, %v3063
        %v3070 = vsel %vm3069, 1, 0
        %v3071 = vadd.s32 %v3067, %v3063
        %v3072 = vadd.s32 %v3068, %v3070
        %v3073 = vadd.s32 %v3072, %v3062
        %v3074 = vadd.s32 %v3073, %v3064
        %v3075 = vand.u32 %v3052, 65535
        %v3076 = vshrl.u32 %v3052, 16
        %v3077 = vand.u32 %v3047, 65535
        %v3078 = vshrl.u32 %v3047, 16
        %v3079 = vmul.u32 %v3075, %v3077
        %v3080 = vmul.u32 %v3075, %v3078
        %v3081 = vmul.u32 %v3076, %v3077
        %v3082 = vmul.u32 %v3076, %v3078
        %v3083 = vshll.u32 %v3080, 16
        %v3084 = vshrl.u32 %v3080, 16
        %v3085 = vshll.u32 %v3081, 16
        %v3086 = vshrl.u32 %v3081, 16
        %vm3087 = vc.u32 %v3079, %v3083
        %v3088 = vsel %vm3087, 1, 0
        %v3089 = vadd.s32 %v3079, %v3083
        %v3090 = vadd.s32 %v3082, %v3088
        %vm3091 = vc.u32 %v3089, %v3085
        %v3092 = vsel %vm3091, 1, 0
        %v3093 = vadd.s32 %v3089, %v3085
        %v3094 = vadd.s32 %v3090, %v3092
        %v3095 = vadd.s32 %v3094, %v3084
        %v3096 = vadd.s32 %v3095, %v3086
        %v3097 = vmul.u32 %v3052, %v3043
        %v3098 = vadd.s32 %v3074, %v3093
        %vm3099 = vc.u32 %v3074, %v3093
        %v3100 = vadd.s32 %v3096, 1
        %v3101 = vsel %vm3099, %v3100, %v3096
        %v3102 = vadd.s32 %v3097, %v3101
        %v3103 = vadd.s32 %v3102, 536870912
        %v3104 = vshrl.u32 %v3103, 30
        %v3105 = vshll.u32 %v3104, 30
        %v3106 = vsub.s32 %v3102, %v3105
        %vm3107 = vcmp.lt.s32.totalorder %v3106, 0
        %v3108 = vsub.s32 0, %v3106
        %v3109 = vsel %vm3107, %v3108, %v3106
        %v3110 = vclz %v3109
        %v3111 = vsub.s32 %v3110, 2
        %vm3112 = vcmp.gt.s32.totalorder 0, %v3111
        %v3113 = vsel %vm3112, 0, %v3111
        %v3114 = vsub.s32 32, %v3113
        %v3115 = vshll.u32 %v3106, %v3113
        %v3116 = vshrl.u32 %v3098, %v3114
        %v3117 = vor.u32 %v3115, %v3116
        %v3118 = vsub.s32 4294967266, %v3113
        %v3119 = vadd.s32 %v3118, 127
        %v3120 = vshll.u32 %v3119, 23
        %v3121 = vor.u32 4788187, %v3120
        %v3122 = vand.u32 2147483647, %v3121
        %v3124 = vcvt.s32.f32 %v3117
        %v3125 = vmul.f32 %v3124, %v3122
        %v3126 = vxor.u32 %v3125, 2147483648
        %v3127 = vsel %vm3006, %v3126, %v3125
        %v3128 = vsub.s32 4, %v3104
        %v3129 = vsel %vm3006, %v3128, %v3104
        %v3130 = vsel %vm3005, %v676, %v3127
        %v3131 = vsel %vm3005, 0, %v3129
        %v3132 = vmul.f32 %v3130, %v3130
        %v3133 = vmul.f32 %v3132, -0.001358992
        %v3134 = vadd.f32 %v3133, 0.041655596
        %v3135 = vmul.f32 %v3132, %v3134
        %v3136 = vadd.f32 %v3135, -0.4999988
        %v3137 = vmul.f32 %v3132, %v3136
        %v3138 = vadd.f32 1.0, %v3137
        %v3139 = vmul.f32 %v3130, %v3130
        %v3140 = vmul.f32 %v3139, -0.00019511016
        %v3141 = vadd.f32 %v3140, 0.008332121
        %v3142 = vmul.f32 %v3139, %v3141
        %v3143 = vadd.f32 %v3142, -0.16666654
        %v3144 = vmul.f32 %v3139, %v3143
        %v3145 = vadd.f32 %v3144, 1.0
        %v3146 = vmul.f32 %v3145, %v3130
        %vm3147 = vweird.f32 %v676
        %v3148 = vand.u32 %v3131, 3
        %vm3149 = vcmp.lt.s32.totalorder %v3148, 2
        %vm3150 = vcmp.eq.s32.totalorder %v3148, 0
        %v3151 = vxor.u32 %v3146, 2147483648
        %v3152 = vsel %vm3150, %v3138, %v3151
        %vm3153 = vcmp.eq.s32.totalorder %v3148, 2
        %v3154 = vxor.u32 %v3138, 2147483648
        %v3155 = vsel %vm3153, %v3154, %v3146
        %v3156 = vsel %vm3149, %v3152, %v3155
        %v3157 = vsel %vm3147, nan, %v3156
        %3158 = vst [vmem:[%s161 + $0x40] sm:$0xff] %v2079
        %3159 = vst [vmem:[%s161 + $0x48] sm:$0xff] %v2233
        %3160 = vst [vmem:[%s161 + $0x50] sm:$0xff] %v2387
        %3161 = vst [vmem:[%s161 + $0x58] sm:$0xff] %v2541
        %3162 = vst [vmem:[%s161 + $0x60] sm:$0xff] %v2695
        %3163 = vst [vmem:[%s161 + $0x68] sm:$0xff] %v2849
        %3164 = vst [vmem:[%s161 + $0x70] sm:$0xff] %v3003
        %3165 = vst [vmem:[%s161 + $0x78] sm:$0xff] %v3157
        %s3166 = sand.u32 %s87, 1
        %s3167 = scalar_lea.sflag [#allocation3], %s3166
        %s3168 = sand.u32 %s87, 1
        %s3169 = smul.addr %s3168, 128
        %s3170 = scalar_lea.vmem [#allocation2], %s3169
        // Predicated region
        $region29: #{tpu_custom_call.1} parent=27 // pred_check
          %p3171 = pneg %p97
        $region30: #{tpu_custom_call.1} parent=27 // pred_check_branch
          %3173 = sbr.rel (%p3171) target = $region32
        $region31: #{tpu_custom_call.1} parent=27 // pred_region
          %s3174 = smul.u32 2, %s20
          %3176 = vsyncadd %s3167, 0
          %s3177 = smul.addr %s21, 16
          %s3178 = sadd.s32 %s3174, %s3177
          %s3179 = smul.addr %s3178, 8
          %s3180 = scalar_lea.hbm %s2, %s3179
          %s3181 = sshll.u32 %s3170, 4
          %s3182 = int_to_ptr.vmem [resolvable:$true] %s3181
          %s3183 = sshll.u32 %s3180, 4
          %s3184 = int_to_ptr.hbm [resolvable:$true] %s3183
          %3189 = dma.vmem_to_hbm [thread:$0]  %s3182, 2048, %s3184, %s3167, 256, 256, 16
        $region32: #{tpu_custom_call.1} parent=27 // pred_fallthru
          _
      $region28: #{tpu_custom_call.1} parent=5 // pred_fallthru
        _
      %p3190 = scmp.le.s32.totalorder 2, %s11
      // Predicated region
      $region33: #{tpu_custom_call.1} parent=5 // pred_check
        %p3191 = pneg %p3190
      $region34: #{tpu_custom_call.1} parent=5 // pred_check_branch
        %3193 = sbr.rel (%p3191) target = $region36
      $region35: #{tpu_custom_call.1} parent=5 // pred_region
        %s3194 = ssub.s32 %s11, 2
        // Predicated region
        $region37: #{tpu_custom_call.1} parent=35 // pred_check
          %p3195 = pneg %p103
        $region38: #{tpu_custom_call.1} parent=35 // pred_check_branch
          %3197 = sbr.rel (%p3195) target = $region40
        $region39: #{tpu_custom_call.1} parent=35 // pred_region
          %s3198 = sand.u32 %s88, 1
          %s3199 = scalar_lea.sflag [#allocation3], %s3198
          %s3200 = sand.u32 %s88, 1
          %s3201 = smul.addr %s3200, 128
          %s3202 = scalar_lea.vmem [#allocation2], %s3201
          %3204 = dma.done %s3199, 2048
        $region40: #{tpu_custom_call.1} parent=35 // pred_fallthru
          _
      $region36: #{tpu_custom_call.1} parent=5 // pred_fallthru
        _
    $region6: #{tpu_custom_call.1} parent=1 // loop_footer
      %s15 = sadd.s32 1, %s11
    $region7: #{tpu_custom_call.1} parent=1 // loop_footer_branch
      %10 = sbr.rel target = $region3
    $region8: #{tpu_custom_call.1} parent=1 // loop_exit
      _
    %3205 = vsyncpa [#allocation3], 1
    %s3206 = scalar_lea.sflag [#allocation3], 1
    %3207 = vsyncpa %s3206, 1

</llo_original>
